<compile_context>
chip_gen: v7x
topology: tpu7x:2x2x1
jax: 0.10.0
libtpu: 0.0.40
codegen_flags: <defaults>
</compile_context>

<pallas_src>
import functools

import jax
import jax.numpy as jnp
from jax.experimental import pallas as pl
from jax.experimental.pallas import tpu as pltpu

IN_DIM = 512
HID_DIM = 512
OUT_DIM = 2
OUT_PAD = 128          # lane-dense padded output width
DEFAULT_MAX_TB = 512   # batch tile cap (multiple of 16)


def _round_up(n, m):
    return ((n + m - 1) // m) * m


def _device_kind():
    try:
        return jax.devices()[0].device_kind.lower()
    except Exception:
        return ""


def _has_bf16_vpu():
    k = _device_kind()
    return ("v6" in k) or ("v7" in k)


def _num_tensorcores():
    # v7x has 2 TensorCores per chip sharing the grid under "parallel".
    return 2 if "v7" in _device_kind() else 1


def _choose_tile(B, max_tb, min_tiles):
    """Pick (tb, Bp): tb multiple of 16, prefer no pad copy, honor min_tiles."""
    Bp16 = _round_up(B, 16)
    if min_tiles > 1 and Bp16 >= 256 * min_tiles:
        max_tb = min(max_tb, _round_up(pl.cdiv(Bp16, min_tiles), 16))
    max_tb = max(16, max_tb - (max_tb % 16))
    if Bp16 <= max_tb:
        return Bp16, Bp16
    # Prefer a multiple-of-16 divisor of Bp16 in [256, max_tb] -> no extra pad.
    tb = max_tb
    while tb >= 256:
        if Bp16 % tb == 0:
            return tb, Bp16
        tb -= 16
    # Fall back: pad the batch up to a multiple of max_tb.
    return max_tb, _round_up(B, max_tb)


def discriminator_kernel(x_ref, w1_ref, b1_ref, w2_ref, b2_ref, w3_ref, b3_ref,
                         o_ref, *, bf16_epilogue):
    # x: (TB, 512) f32 (cast to bf16 in-kernel); weights bf16; biases f32;
    # output logits f32 (TB, 128).
    x = x_ref[...].astype(jnp.bfloat16)

    if bf16_epilogue:
        # v6e/v7x: bf16 VALU — do bias-add + ReLU in packed bf16.
        h = jnp.dot(x, w1_ref[...], preferred_element_type=jnp.float32)
        h = jnp.maximum(h.astype(jnp.bfloat16) + b1_ref[...].astype(jnp.bfloat16), 0)
        h = jnp.dot(h, w2_ref[...], preferred_element_type=jnp.float32)
        h = jnp.maximum(h.astype(jnp.bfloat16) + b2_ref[...].astype(jnp.bfloat16), 0)
    else:
        # v5e: no bf16 VPU — keep the epilogue in f32.
        h = jnp.dot(x, w1_ref[...], preferred_element_type=jnp.float32) + b1_ref[...]
        h = jnp.maximum(h, 0.0).astype(jnp.bfloat16)
        h = jnp.dot(h, w2_ref[...], preferred_element_type=jnp.float32) + b2_ref[...]
        h = jnp.maximum(h, 0.0).astype(jnp.bfloat16)

    # Linear(512, 2) padded to 128 lanes, f32 accumulate + f32 bias.
    z = jnp.dot(h, w3_ref[...], preferred_element_type=jnp.float32) + b3_ref[...]
    o_ref[...] = z.astype(o_ref.dtype)


def prepare_params(params):
    """One-time host-side prep: cast weights to bf16, pad last layer to 128 lanes."""
    w1, b1, w2, b2, w3, b3 = params
    w3p = jnp.zeros((HID_DIM, OUT_PAD), jnp.float32).at[:, :OUT_DIM].set(w3)
    b3p = jnp.zeros((1, OUT_PAD), jnp.float32).at[:, :OUT_DIM].set(b3)
    return (w1.astype(jnp.bfloat16), b1.astype(jnp.float32),
            w2.astype(jnp.bfloat16), b2.astype(jnp.float32),
            w3p.astype(jnp.bfloat16), b3p.astype(jnp.float32))


@functools.partial(jax.jit, static_argnames=("max_tb",))
def discriminator_forward(x, kparams, max_tb=DEFAULT_MAX_TB):
    """x: (B, 512) f32.  kparams: output of prepare_params.  Returns (B, 2) f32."""
    w1, b1, w2, b2, w3p, b3p = kparams
    B = x.shape[0]

    bf16_ep = _has_bf16_vpu()
    tb, Bp = _choose_tile(B, max_tb, min_tiles=_num_tensorcores())
    n_tiles = Bp // tb

    x_in = x
    if Bp != B:
        x_in = jnp.pad(x, ((0, Bp - B), (0, 0)))

    flops = 2 * Bp * HID_DIM * (IN_DIM + HID_DIM + OUT_PAD)
    bytes_accessed = (
        Bp * IN_DIM * 4                                   # x (f32, cast in-kernel)
        + (IN_DIM * HID_DIM + HID_DIM * HID_DIM) * 2      # w1, w2 (bf16)
        + HID_DIM * OUT_PAD * 2                           # w3 padded (bf16)
        + (HID_DIM + HID_DIM + OUT_PAD) * 4               # biases (f32)
        + Bp * OUT_PAD * 4                                # logits out (f32)
    )

    const = lambda i: (0, 0)  # weights/biases stay VMEM-resident across grid steps

    z = pl.pallas_call(
        functools.partial(discriminator_kernel, bf16_epilogue=bf16_ep),
        out_shape=jax.ShapeDtypeStruct((Bp, OUT_PAD), jnp.float32),
        grid_spec=pltpu.PrefetchScalarGridSpec(
            num_scalar_prefetch=0,
            grid=(n_tiles,),
            in_specs=[
                pl.BlockSpec((tb, IN_DIM), lambda i: (i, 0)),     # x tile (streamed)
                pl.BlockSpec((IN_DIM, HID_DIM), const),           # w1
                pl.BlockSpec((1, HID_DIM), const),                # b1
                pl.BlockSpec((HID_DIM, HID_DIM), const),          # w2
                pl.BlockSpec((1, HID_DIM), const),                # b2
                pl.BlockSpec((HID_DIM, OUT_PAD), const),          # w3 (padded)
                pl.BlockSpec((1, OUT_PAD), const),                # b3 (padded)
            ],
            out_specs=pl.BlockSpec((tb, OUT_PAD), lambda i: (i, 0)),
        ),
        compiler_params=pltpu.CompilerParams(
            dimension_semantics=("parallel",),
            vmem_limit_bytes=32 * 1024 * 1024,
        ),
        cost_estimate=pl.CostEstimate(
            flops=flops, transcendentals=0, bytes_accessed=bytes_accessed),
    )(x_in, w1, b1, w2, b2, w3p, b3p)

    # Unpad rows/lanes, then LogSoftmax over dim=0 (batch axis) as in nn.LogSoftmax(dim=0).
    logits = z[:B, :OUT_DIM]
    return jax.nn.log_softmax(logits, axis=0)


def init_params(key):
    """Deterministic init mimicking PyTorch nn.Linear default (uniform +/- 1/sqrt(fan_in))."""
    ks = jax.random.split(key, 6)

    def lin(kw, kb, fan_in, fan_out):
        bound = 1.0 / jnp.sqrt(fan_in)
        w = jax.random.uniform(kw, (fan_in, fan_out), jnp.float32, -bound, bound)
        b = jax.random.uniform(kb, (1, fan_out), jnp.float32, -bound, bound)
        return w, b

    w1, b1 = lin(ks[0], ks[1], IN_DIM, HID_DIM)
    w2, b2 = lin(ks[2], ks[3], HID_DIM, HID_DIM)
    w3, b3 = lin(ks[4], ks[5], HID_DIM, OUT_DIM)
    return (w1, b1, w2, b2, w3, b3)


def reference_forward_f32(x, params):
    """Pure-JAX f32 reference of the PyTorch forward."""
    w1, b1, w2, b2, w3, b3 = params
    h = jnp.maximum(x @ w1 + b1, 0.0)
    h = jnp.maximum(h @ w2 + b2, 0.0)
    z = h @ w3 + b3
    return jax.nn.log_softmax(z, axis=0)


def reference_forward_kernel_path(x, params, bf16_epilogue):
    """Pure-JAX reference mirroring the kernel's bf16 MXU / f32-accumulate path."""
    w1, b1, w2, b2, w3, b3 = params
    xb = x.astype(jnp.bfloat16)
    if bf16_epilogue:
        h = jnp.dot(xb, w1.astype(jnp.bfloat16), preferred_element_type=jnp.float32)
        h = jnp.maximum(h.astype(jnp.bfloat16) + b1.astype(jnp.bfloat16), 0)
        h = jnp.dot(h, w2.astype(jnp.bfloat16), preferred_element_type=jnp.float32)
        h = jnp.maximum(h.astype(jnp.bfloat16) + b2.astype(jnp.bfloat16), 0)
    else:
        h = jnp.dot(xb, w1.astype(jnp.bfloat16), preferred_element_type=jnp.float32) + b1
        h = jnp.maximum(h, 0.0).astype(jnp.bfloat16)
        h = jnp.dot(h, w2.astype(jnp.bfloat16), preferred_element_type=jnp.float32) + b2
        h = jnp.maximum(h, 0.0).astype(jnp.bfloat16)
    z = jnp.dot(h, w3.astype(jnp.bfloat16), preferred_element_type=jnp.float32) + b3
    return jax.nn.log_softmax(z, axis=0)


if __name__ == "__main__":
    key = jax.random.PRNGKey(0)
    k_x, k_p = jax.random.split(key)

    B = 8  # small batch
    x = jax.random.normal(k_x, (B, IN_DIM), jnp.float32)
    params = init_params(k_p)
    kparams = prepare_params(params)   # one-time cast/pad of weights

    out = discriminator_forward(x, kparams)
    out = jax.block_until_ready(out)
    assert out.shape == (B, OUT_DIM)

    # Check against a precision-matched (bf16 MXU, f32 accumulate) reference.
    ref_path = reference_forward_kernel_path(x, params, _has_bf16_vpu())
    assert jnp.allclose(out, ref_path, atol=1e-2, rtol=1e-2), (
        jnp.max(jnp.abs(out - ref_path)))

    # Loose check against the full-f32 PyTorch-equivalent reference.
    ref_f32 = reference_forward_f32(x, params)
    assert jnp.allclose(out, ref_f32, atol=5e-2, rtol=5e-2), (
        jnp.max(jnp.abs(out - ref_f32)))

    print("KERNEL_OK")
</pallas_src>

<mosaic_0001>
module attributes {stable_mosaic.version = 11 : i64} {
  func.func @discriminator_kernel(%arg0: i32, %arg1: memref<16x512xf32, #tpu.memory_space<vmem>>, %arg2: memref<512x512xbf16, #tpu.memory_space<vmem>>, %arg3: memref<1x512xf32, #tpu.memory_space<vmem>>, %arg4: memref<512x512xbf16, #tpu.memory_space<vmem>>, %arg5: memref<1x512xf32, #tpu.memory_space<vmem>>, %arg6: memref<512x128xbf16, #tpu.memory_space<vmem>>, %arg7: memref<1x128xf32, #tpu.memory_space<vmem>>, %arg8: memref<16x128xf32, #tpu.memory_space<vmem>>) attributes {dimension_semantics = [#tpu.dimension_semantics<parallel>], iteration_bounds = array<i64: 1>, scalar_prefetch = 0 : i64, scratch_operands = 0 : i64, tpu.core_type = #tpu.core_type<tc>, window_params = [{transform_indices = @transform_0, window_bounds = array<i64: 16, 512>}, {pipeline_mode = #tpu.pipeline_mode<synchronous>, transform_indices = @transform_1, window_bounds = array<i64: 512, 512>}, {pipeline_mode = #tpu.pipeline_mode<synchronous>, transform_indices = @transform_2, window_bounds = array<i64: 1, 512>}, {pipeline_mode = #tpu.pipeline_mode<synchronous>, transform_indices = @transform_3, window_bounds = array<i64: 512, 512>}, {pipeline_mode = #tpu.pipeline_mode<synchronous>, transform_indices = @transform_4, window_bounds = array<i64: 1, 512>}, {pipeline_mode = #tpu.pipeline_mode<synchronous>, transform_indices = @transform_5, window_bounds = array<i64: 512, 128>}, {pipeline_mode = #tpu.pipeline_mode<synchronous>, transform_indices = @transform_6, window_bounds = array<i64: 1, 128>}, {transform_indices = @transform_7, window_bounds = array<i64: 16, 128>}]} {
    %c0 = arith.constant 0 : index
    %c0_0 = arith.constant 0 : index
    %0 = vector.load %arg1[%c0, %c0_0] : memref<16x512xf32, #tpu.memory_space<vmem>>, vector<16x512xf32>
    %1 = arith.truncf %0 : vector<16x512xf32> to vector<16x512xbf16>
    %c0_1 = arith.constant 0 : index
    %c0_2 = arith.constant 0 : index
    %2 = vector.load %arg2[%c0_1, %c0_2] : memref<512x512xbf16, #tpu.memory_space<vmem>>, vector<512x512xbf16>
    %cst = arith.constant dense<0.000000e+00> : vector<16x512xf32>
    %3 = tpu.matmul %1, %2, %cst {dimension_numbers = #tpu.dot_dimension_numbers<[1], [0], [0], [1], [0, 0, 1, 1], [], []>} : vector<16x512xbf16>, vector<512x512xbf16>, vector<16x512xf32> -> vector<16x512xf32>
    %c0_3 = arith.constant 0 : index
    %c0_4 = arith.constant 0 : index
    %4 = vector.load %arg3[%c0_3, %c0_4] : memref<1x512xf32, #tpu.memory_space<vmem>>, vector<1x512xf32>
    %5 = vector.broadcast %4 : vector<1x512xf32> to vector<16x512xf32>
    %6 = arith.addf %3, %5 : vector<16x512xf32>
    %cst_5 = arith.constant 0.000000e+00 : f32
    %7 = vector.broadcast %cst_5 : f32 to vector<16x512xf32>
    %8 = arith.maximumf %6, %7 : vector<16x512xf32>
    %9 = arith.truncf %8 : vector<16x512xf32> to vector<16x512xbf16>
    %c0_6 = arith.constant 0 : index
    %c0_7 = arith.constant 0 : index
    %10 = vector.load %arg4[%c0_6, %c0_7] : memref<512x512xbf16, #tpu.memory_space<vmem>>, vector<512x512xbf16>
    %cst_8 = arith.constant dense<0.000000e+00> : vector<16x512xf32>
    %11 = tpu.matmul %9, %10, %cst_8 {dimension_numbers = #tpu.dot_dimension_numbers<[1], [0], [0], [1], [0, 0, 1, 1], [], []>} : vector<16x512xbf16>, vector<512x512xbf16>, vector<16x512xf32> -> vector<16x512xf32>
    %c0_9 = arith.constant 0 : index
    %c0_10 = arith.constant 0 : index
    %12 = vector.load %arg5[%c0_9, %c0_10] : memref<1x512xf32, #tpu.memory_space<vmem>>, vector<1x512xf32>
    %13 = vector.broadcast %12 : vector<1x512xf32> to vector<16x512xf32>
    %14 = arith.addf %11, %13 : vector<16x512xf32>
    %cst_11 = arith.constant 0.000000e+00 : f32
    %15 = vector.broadcast %cst_11 : f32 to vector<16x512xf32>
    %16 = arith.maximumf %14, %15 : vector<16x512xf32>
    %17 = arith.truncf %16 : vector<16x512xf32> to vector<16x512xbf16>
    %c0_12 = arith.constant 0 : index
    %c0_13 = arith.constant 0 : index
    %18 = vector.load %arg6[%c0_12, %c0_13] : memref<512x128xbf16, #tpu.memory_space<vmem>>, vector<512x128xbf16>
    %cst_14 = arith.constant dense<0.000000e+00> : vector<16x128xf32>
    %19 = tpu.matmul %17, %18, %cst_14 {dimension_numbers = #tpu.dot_dimension_numbers<[1], [0], [0], [1], [0, 0, 1, 1], [], []>} : vector<16x512xbf16>, vector<512x128xbf16>, vector<16x128xf32> -> vector<16x128xf32>
    %c0_15 = arith.constant 0 : index
    %c0_16 = arith.constant 0 : index
    %20 = vector.load %arg7[%c0_15, %c0_16] : memref<1x128xf32, #tpu.memory_space<vmem>>, vector<1x128xf32>
    %21 = vector.broadcast %20 : vector<1x128xf32> to vector<16x128xf32>
    %22 = arith.addf %19, %21 : vector<16x128xf32>
    %c0_17 = arith.constant 0 : index
    %c0_18 = arith.constant 0 : index
    %23 = vector.load %arg8[%c0_17, %c0_18] : memref<16x128xf32, #tpu.memory_space<vmem>>, vector<16x128xf32>
    tpu.vector_store %arg8[%c0_17, %c0_18], %22 {strides = array<i32>} : memref<16x128xf32, #tpu.memory_space<vmem>>, vector<16x128xf32>,
    return
  }
  func.func @transform_0(%arg0: i32) -> (i32, i32) {
    %c0_i32 = arith.constant 0 : i32
    %c0_i32_0 = arith.constant 0 : i32
    return %arg0, %c0_i32 : i32, i32
  }
  func.func @transform_1(%arg0: i32) -> (i32, i32) {
    %c0_i32 = arith.constant 0 : i32
    %c0_i32_0 = arith.constant 0 : i32
    %c0_i32_1 = arith.constant 0 : i32
    return %c0_i32, %c0_i32_0 : i32, i32
  }
  func.func @transform_2(%arg0: i32) -> (i32, i32) {
    %c0_i32 = arith.constant 0 : i32
    %c0_i32_0 = arith.constant 0 : i32
    %c0_i32_1 = arith.constant 0 : i32
    return %c0_i32, %c0_i32_0 : i32, i32
  }
  func.func @transform_3(%arg0: i32) -> (i32, i32) {
    %c0_i32 = arith.constant 0 : i32
    %c0_i32_0 = arith.constant 0 : i32
    %c0_i32_1 = arith.constant 0 : i32
    return %c0_i32, %c0_i32_0 : i32, i32
  }
  func.func @transform_4(%arg0: i32) -> (i32, i32) {
    %c0_i32 = arith.constant 0 : i32
    %c0_i32_0 = arith.constant 0 : i32
    %c0_i32_1 = arith.constant 0 : i32
    return %c0_i32, %c0_i32_0 : i32, i32
  }
  func.func @transform_5(%arg0: i32) -> (i32, i32) {
    %c0_i32 = arith.constant 0 : i32
    %c0_i32_0 = arith.constant 0 : i32
    %c0_i32_1 = arith.constant 0 : i32
    return %c0_i32, %c0_i32_0 : i32, i32
  }
  func.func @transform_6(%arg0: i32) -> (i32, i32) {
    %c0_i32 = arith.constant 0 : i32
    %c0_i32_0 = arith.constant 0 : i32
    %c0_i32_1 = arith.constant 0 : i32
    return %c0_i32, %c0_i32_0 : i32, i32
  }
  func.func @transform_7(%arg0: i32) -> (i32, i32) {
    %c0_i32 = arith.constant 0 : i32
    %c0_i32_0 = arith.constant 0 : i32
    return %arg0, %c0_i32 : i32, i32
  }
}

</mosaic_0001>

<llo_original>
// kernel: discriminator_forward.1
$region0: #{discriminator_forward.1}
  #allocation0 [shape = 'u32[]', space=smem, size = 0x4, offset = 0x4, fixed_abs, tag = 'smem constant byte address 0x4 - core index']
  #allocation1 [shape = 'u32[144,128]{1,0:T(1,128)}', space=vmem, size = 0x12000, scoped, tag = 'internal scratch']
  %s0 = inlined_call_operand.vmem [shape: f32[16,512], index: 0, kind: input, shape index: {}]
  %s1 = inlined_call_operand.hbm [shape: bf16[512,512], index: 1, kind: input, shape index: {}]
  %s2 = inlined_call_operand.vmem [shape: f32[1,512], index: 2, kind: input, shape index: {}]
  %s3 = inlined_call_operand.hbm [shape: bf16[512,512], index: 3, kind: input, shape index: {}]
  %s4 = inlined_call_operand.vmem [shape: f32[1,512], index: 4, kind: input, shape index: {}]
  %s5 = inlined_call_operand.hbm [shape: bf16[512,128], index: 5, kind: input, shape index: {}]
  %s6 = inlined_call_operand.vmem [shape: f32[1,128], index: 6, kind: input, shape index: {}]
  %s7 = inlined_call_operand.vmem [shape: f32[16,128], index: 7, kind: output, shape index: {}]
  %s8 = sld [smem:[#allocation0]]
  $region50: #{discriminator_forward.1} parent=0
    _
  %s10 = ssub.s32 1, %s8
  %s11 = scalar_select 0, %s10, %s8
  $region1: #{discriminator_forward.1} parent=0
    #allocation2 [shape = 'u8[524288]{0}', space=vmem, size = 0x80000, scoped, tag = 'input window, operand 1, single buffered']
    #allocation3 [shape = 's32[1]{0}', space=sflag, size = 0x4, scoped, tag = 'scoped memory for discriminator_forward.1']
    #allocation4 [shape = 'u8[524288]{0}', space=vmem, size = 0x80000, scoped, tag = 'input window, operand 3, single buffered']
    #allocation5 [shape = 's32[1]{0}', space=sflag, size = 0x4, scoped, tag = 'scoped memory for discriminator_forward.1']
    #allocation6 [shape = 'u8[131072]{0}', space=vmem, size = 0x20000, scoped, tag = 'input window, operand 5, single buffered']
    %12 = vsyncpa [#allocation3], 0
    %13 = vsyncpa [#allocation5], 0
    // Predicated region
    $region2: #{discriminator_forward.1} parent=1 // pred_check
      _
    $region3: #{discriminator_forward.1} parent=1 // pred_check_branch
      %15 = sbr.rel (0) target = $region5
    $region4: #{discriminator_forward.1} parent=1 // pred_region
      _
    $region5: #{discriminator_forward.1} parent=1 // pred_fallthru
      _
    // Predicated region
    $region6: #{discriminator_forward.1} parent=1 // pred_check
      _
    $region7: #{discriminator_forward.1} parent=1 // pred_check_branch
      %17 = sbr.rel (0) target = $region9
    $region8: #{discriminator_forward.1} parent=1 // pred_region
      %s19 = ssub.s32 16384, 16384
      %20 = vsyncadd [#allocation3], %s19
      %s21 = sshll.u32 [#allocation2], 4
      %s22 = int_to_ptr.vmem [resolvable:$true] %s21
      %27 = dma.hbm_to_vmem [thread:$0]  %s1, 16384, %s22, [#allocation3], 256, 256, 16
    $region9: #{discriminator_forward.1} parent=1 // pred_fallthru
      _
    // Predicated region
    $region10: #{discriminator_forward.1} parent=1 // pred_check
      _
    $region11: #{discriminator_forward.1} parent=1 // pred_check_branch
      %29 = sbr.rel (0) target = $region13
    $region12: #{discriminator_forward.1} parent=1 // pred_region
      _
    $region13: #{discriminator_forward.1} parent=1 // pred_fallthru
      _
    // Predicated region
    $region14: #{discriminator_forward.1} parent=1 // pred_check
      _
    $region15: #{discriminator_forward.1} parent=1 // pred_check_branch
      %31 = sbr.rel (0) target = $region17
    $region16: #{discriminator_forward.1} parent=1 // pred_region
      %s33 = ssub.s32 16384, 16384
      %34 = vsyncadd [#allocation5], %s33
      %s35 = sshll.u32 [#allocation4], 4
      %s36 = int_to_ptr.vmem [resolvable:$true] %s35
      %41 = dma.hbm_to_vmem [thread:$0]  %s3, 16384, %s36, [#allocation5], 256, 256, 16
    $region17: #{discriminator_forward.1} parent=1 // pred_fallthru
      _
    // Predicated region
    $region18: #{discriminator_forward.1} parent=1 // pred_check
      _
    $region19: #{discriminator_forward.1} parent=1 // pred_check_branch
      %43 = sbr.rel (0) target = $region21
    $region20: #{discriminator_forward.1} parent=1 // pred_region
      _
    $region21: #{discriminator_forward.1} parent=1 // pred_fallthru
      _
    // Predicated region
    $region22: #{discriminator_forward.1} parent=1 // pred_check
      _
    $region23: #{discriminator_forward.1} parent=1 // pred_check_branch
      %45 = sbr.rel (0) target = $region25
    $region24: #{discriminator_forward.1} parent=1 // pred_region
      %s47 = ssub.s32 4096, 4096
      %48 = vsyncadd [#allocation5], %s47
      %s49 = sshll.u32 [#allocation6], 4
      %s50 = int_to_ptr.vmem [resolvable:$true] %s49
      %55 = dma.hbm_to_vmem [thread:$0]  %s5, 4096, %s50, [#allocation5], 64, 64, 4
    $region25: #{discriminator_forward.1} parent=1 // pred_fallthru
      _
    // Predicated region
    $region26: #{discriminator_forward.1} parent=1 // pred_check
      _
    $region27: #{discriminator_forward.1} parent=1 // pred_check_branch
      %57 = sbr.rel (0) target = $region29
    $region28: #{discriminator_forward.1} parent=1 // pred_region
      _
    $region29: #{discriminator_forward.1} parent=1 // pred_fallthru
      _
    // Predicated region
    $region30: #{discriminator_forward.1} parent=1 // pred_check
      _
    $region31: #{discriminator_forward.1} parent=1 // pred_check_branch
      %59 = sbr.rel (0) target = $region33
    $region32: #{discriminator_forward.1} parent=1 // pred_region
      %60 = dma.done [#allocation3], 16384
    $region33: #{discriminator_forward.1} parent=1 // pred_fallthru
      _
    // Predicated region
    $region34: #{discriminator_forward.1} parent=1 // pred_check
      _
    $region35: #{discriminator_forward.1} parent=1 // pred_check_branch
      %62 = sbr.rel (0) target = $region37
    $region36: #{discriminator_forward.1} parent=1 // pred_region
      %63 = dma.done [#allocation5], 16384
    $region37: #{discriminator_forward.1} parent=1 // pred_fallthru
      _
    // Predicated region
    $region38: #{discriminator_forward.1} parent=1 // pred_check
      _
    $region39: #{discriminator_forward.1} parent=1 // pred_check_branch
      %65 = sbr.rel (0) target = $region41
    $region40: #{discriminator_forward.1} parent=1 // pred_region
      %66 = dma.done [#allocation5], 4096
    $region41: #{discriminator_forward.1} parent=1 // pred_fallthru
      _
    %v68 = vld [vmem:[%s0] sm:$0xff]
    %v69 = vld [vmem:[%s0 + $0x8] sm:$0xff]
    %v70 = vld [vmem:[%s0 + $0x10] sm:$0xff]
    %v71 = vld [vmem:[%s0 + $0x18] sm:$0xff]
    %v72 = vld [vmem:[%s0 + $0x20] sm:$0xff]
    %v73 = vld [vmem:[%s0 + $0x28] sm:$0xff]
    %v74 = vld [vmem:[%s0 + $0x30] sm:$0xff]
    %v75 = vld [vmem:[%s0 + $0x38] sm:$0xff]
    %v76 = vpack.c.bf16 %v72, %v68
    %v77 = vpack.c.bf16 %v73, %v69
    %v78 = vpack.c.bf16 %v74, %v70
    %v79 = vpack.c.bf16 %v75, %v71
    %v80 = vld [vmem:[#allocation2] sm:$0xff]
    %v81 = vld [vmem:[#allocation2 + $0x8] sm:$0xff]
    %v82 = vld [vmem:[#allocation2 + $0x10] sm:$0xff]
    %v83 = vld [vmem:[#allocation2 + $0x18] sm:$0xff]
    %v84 = vld [vmem:[#allocation2 + $0x20] sm:$0xff]
    %v85 = vld [vmem:[#allocation2 + $0x28] sm:$0xff]
    %v86 = vld [vmem:[#allocation2 + $0x30] sm:$0xff]
    %v87 = vld [vmem:[#allocation2 + $0x38] sm:$0xff]
    %v88 = vld [vmem:[#allocation2 + $0x40] sm:$0xff]
    %v89 = vld [vmem:[#allocation2 + $0x48] sm:$0xff]
    %v90 = vld [vmem:[#allocation2 + $0x50] sm:$0xff]
    %v91 = vld [vmem:[#allocation2 + $0x58] sm:$0xff]
    %v92 = vld [vmem:[#allocation2 + $0x60] sm:$0xff]
    %v93 = vld [vmem:[#allocation2 + $0x68] sm:$0xff]
    %v94 = vld [vmem:[#allocation2 + $0x70] sm:$0xff]
    %v95 = vld [vmem:[#allocation2 + $0x78] sm:$0xff]
    %v96 = vld [vmem:[#allocation2 + $0x80] sm:$0xff]
    %v97 = vld [vmem:[#allocation2 + $0x88] sm:$0xff]
    %v98 = vld [vmem:[#allocation2 + $0x90] sm:$0xff]
    %v99 = vld [vmem:[#allocation2 + $0x98] sm:$0xff]
    %v100 = vld [vmem:[#allocation2 + $0xa0] sm:$0xff]
    %v101 = vld [vmem:[#allocation2 + $0xa8] sm:$0xff]
    %v102 = vld [vmem:[#allocation2 + $0xb0] sm:$0xff]
    %v103 = vld [vmem:[#allocation2 + $0xb8] sm:$0xff]
    %v104 = vld [vmem:[#allocation2 + $0xc0] sm:$0xff]
    %v105 = vld [vmem:[#allocation2 + $0xc8] sm:$0xff]
    %v106 = vld [vmem:[#allocation2 + $0xd0] sm:$0xff]
    %v107 = vld [vmem:[#allocation2 + $0xd8] sm:$0xff]
    %v108 = vld [vmem:[#allocation2 + $0xe0] sm:$0xff]
    %v109 = vld [vmem:[#allocation2 + $0xe8] sm:$0xff]
    %v110 = vld [vmem:[#allocation2 + $0xf0] sm:$0xff]
    %v111 = vld [vmem:[#allocation2 + $0xf8] sm:$0xff]
    %v112 = vld [vmem:[#allocation2 + $0x100] sm:$0xff]
    %v113 = vld [vmem:[#allocation2 + $0x108] sm:$0xff]
    %v114 = vld [vmem:[#allocation2 + $0x110] sm:$0xff]
    %v115 = vld [vmem:[#allocation2 + $0x118] sm:$0xff]
    %v116 = vld [vmem:[#allocation2 + $0x120] sm:$0xff]
    %v117 = vld [vmem:[#allocation2 + $0x128] sm:$0xff]
    %v118 = vld [vmem:[#allocation2 + $0x130] sm:$0xff]
    %v119 = vld [vmem:[#allocation2 + $0x138] sm:$0xff]
    %v120 = vld [vmem:[#allocation2 + $0x140] sm:$0xff]
    %v121 = vld [vmem:[#allocation2 + $0x148] sm:$0xff]
    %v122 = vld [vmem:[#allocation2 + $0x150] sm:$0xff]
    %v123 = vld [vmem:[#allocation2 + $0x158] sm:$0xff]
    %v124 = vld [vmem:[#allocation2 + $0x160] sm:$0xff]
    %v125 = vld [vmem:[#allocation2 + $0x168] sm:$0xff]
    %v126 = vld [vmem:[#allocation2 + $0x170] sm:$0xff]
    %v127 = vld [vmem:[#allocation2 + $0x178] sm:$0xff]
    %v128 = vld [vmem:[#allocation2 + $0x180] sm:$0xff]
    %v129 = vld [vmem:[#allocation2 + $0x188] sm:$0xff]
    %v130 = vld [vmem:[#allocation2 + $0x190] sm:$0xff]
    %v131 = vld [vmem:[#allocation2 + $0x198] sm:$0xff]
    %v132 = vld [vmem:[#allocation2 + $0x1a0] sm:$0xff]
    %v133 = vld [vmem:[#allocation2 + $0x1a8] sm:$0xff]
    %v134 = vld [vmem:[#allocation2 + $0x1b0] sm:$0xff]
    %v135 = vld [vmem:[#allocation2 + $0x1b8] sm:$0xff]
    %v136 = vld [vmem:[#allocation2 + $0x1c0] sm:$0xff]
    %v137 = vld [vmem:[#allocation2 + $0x1c8] sm:$0xff]
    %v138 = vld [vmem:[#allocation2 + $0x1d0] sm:$0xff]
    %v139 = vld [vmem:[#allocation2 + $0x1d8] sm:$0xff]
    %v140 = vld [vmem:[#allocation2 + $0x1e0] sm:$0xff]
    %v141 = vld [vmem:[#allocation2 + $0x1e8] sm:$0xff]
    %v142 = vld [vmem:[#allocation2 + $0x1f0] sm:$0xff]
    %v143 = vld [vmem:[#allocation2 + $0x1f8] sm:$0xff]
    %v144 = vld [vmem:[#allocation2 + $0x200] sm:$0xff]
    %v145 = vld [vmem:[#allocation2 + $0x208] sm:$0xff]
    %v146 = vld [vmem:[#allocation2 + $0x210] sm:$0xff]
    %v147 = vld [vmem:[#allocation2 + $0x218] sm:$0xff]
    %v148 = vld [vmem:[#allocation2 + $0x220] sm:$0xff]
    %v149 = vld [vmem:[#allocation2 + $0x228] sm:$0xff]
    %v150 = vld [vmem:[#allocation2 + $0x230] sm:$0xff]
    %v151 = vld [vmem:[#allocation2 + $0x238] sm:$0xff]
    %v152 = vld [vmem:[#allocation2 + $0x240] sm:$0xff]
    %v153 = vld [vmem:[#allocation2 + $0x248] sm:$0xff]
    %v154 = vld [vmem:[#allocation2 + $0x250] sm:$0xff]
    %v155 = vld [vmem:[#allocation2 + $0x258] sm:$0xff]
    %v156 = vld [vmem:[#allocation2 + $0x260] sm:$0xff]
    %v157 = vld [vmem:[#allocation2 + $0x268] sm:$0xff]
    %v158 = vld [vmem:[#allocation2 + $0x270] sm:$0xff]
    %v159 = vld [vmem:[#allocation2 + $0x278] sm:$0xff]
    %v160 = vld [vmem:[#allocation2 + $0x280] sm:$0xff]
    %v161 = vld [vmem:[#allocation2 + $0x288] sm:$0xff]
    %v162 = vld [vmem:[#allocation2 + $0x290] sm:$0xff]
    %v163 = vld [vmem:[#allocation2 + $0x298] sm:$0xff]
    %v164 = vld [vmem:[#allocation2 + $0x2a0] sm:$0xff]
    %v165 = vld [vmem:[#allocation2 + $0x2a8] sm:$0xff]
    %v166 = vld [vmem:[#allocation2 + $0x2b0] sm:$0xff]
    %v167 = vld [vmem:[#allocation2 + $0x2b8] sm:$0xff]
    %v168 = vld [vmem:[#allocation2 + $0x2c0] sm:$0xff]
    %v169 = vld [vmem:[#allocation2 + $0x2c8] sm:$0xff]
    %v170 = vld [vmem:[#allocation2 + $0x2d0] sm:$0xff]
    %v171 = vld [vmem:[#allocation2 + $0x2d8] sm:$0xff]
    %v172 = vld [vmem:[#allocation2 + $0x2e0] sm:$0xff]
    %v173 = vld [vmem:[#allocation2 + $0x2e8] sm:$0xff]
    %v174 = vld [vmem:[#allocation2 + $0x2f0] sm:$0xff]
    %v175 = vld [vmem:[#allocation2 + $0x2f8] sm:$0xff]
    %v176 = vld [vmem:[#allocation2 + $0x300] sm:$0xff]
    %v177 = vld [vmem:[#allocation2 + $0x308] sm:$0xff]
    %v178 = vld [vmem:[#allocation2 + $0x310] sm:$0xff]
    %v179 = vld [vmem:[#allocation2 + $0x318] sm:$0xff]
    %v180 = vld [vmem:[#allocation2 + $0x320] sm:$0xff]
    %v181 = vld [vmem:[#allocation2 + $0x328] sm:$0xff]
    %v182 = vld [vmem:[#allocation2 + $0x330] sm:$0xff]
    %v183 = vld [vmem:[#allocation2 + $0x338] sm:$0xff]
    %v184 = vld [vmem:[#allocation2 + $0x340] sm:$0xff]
    %v185 = vld [vmem:[#allocation2 + $0x348] sm:$0xff]
    %v186 = vld [vmem:[#allocation2 + $0x350] sm:$0xff]
    %v187 = vld [vmem:[#allocation2 + $0x358] sm:$0xff]
    %v188 = vld [vmem:[#allocation2 + $0x360] sm:$0xff]
    %v189 = vld [vmem:[#allocation2 + $0x368] sm:$0xff]
    %v190 = vld [vmem:[#allocation2 + $0x370] sm:$0xff]
    %v191 = vld [vmem:[#allocation2 + $0x378] sm:$0xff]
    %v192 = vld [vmem:[#allocation2 + $0x380] sm:$0xff]
    %v193 = vld [vmem:[#allocation2 + $0x388] sm:$0xff]
    %v194 = vld [vmem:[#allocation2 + $0x390] sm:$0xff]
    %v195 = vld [vmem:[#allocation2 + $0x398] sm:$0xff]
    %v196 = vld [vmem:[#allocation2 + $0x3a0] sm:$0xff]
    %v197 = vld [vmem:[#allocation2 + $0x3a8] sm:$0xff]
    %v198 = vld [vmem:[#allocation2 + $0x3b0] sm:$0xff]
    %v199 = vld [vmem:[#allocation2 + $0x3b8] sm:$0xff]
    %v200 = vld [vmem:[#allocation2 + $0x3c0] sm:$0xff]
    %v201 = vld [vmem:[#allocation2 + $0x3c8] sm:$0xff]
    %v202 = vld [vmem:[#allocation2 + $0x3d0] sm:$0xff]
    %v203 = vld [vmem:[#allocation2 + $0x3d8] sm:$0xff]
    %v204 = vld [vmem:[#allocation2 + $0x3e0] sm:$0xff]
    %v205 = vld [vmem:[#allocation2 + $0x3e8] sm:$0xff]
    %v206 = vld [vmem:[#allocation2 + $0x3f0] sm:$0xff]
    %v207 = vld [vmem:[#allocation2 + $0x3f8] sm:$0xff]
    %v208 = vld [vmem:[%s2] sm:$0xf]
    %v210 = vlaneseq
    %v211 = vshrl.u32 %v210, 7
    %v212 = vsub.s32 0, %v211
    %v213 = vrot.slane %v208, %v212
    %v214 = vlaneseq
    %v215 = vshrl.u32 %v214, 7
    %v216 = vsub.s32 1, %v215
    %v217 = vrot.slane %v208, %v216
    %v218 = vlaneseq
    %v219 = vshrl.u32 %v218, 7
    %v220 = vsub.s32 2, %v219
    %v221 = vrot.slane %v208, %v220
    %v222 = vlaneseq
    %v223 = vshrl.u32 %v222, 7
    %v224 = vsub.s32 3, %v223
    %v225 = vrot.slane %v208, %v224
    %v358 = vunpack.c.l.b16 %v80
    %v359 = vunpack.c.h.b16 %v80
    %v360 = vunpack.c.l.b16 %v81
    %v361 = vunpack.c.h.b16 %v81
    %v362 = vunpack.c.l.b16 %v82
    %v363 = vunpack.c.h.b16 %v82
    %v364 = vunpack.c.l.b16 %v83
    %v365 = vunpack.c.h.b16 %v83
    %v366 = vunpack.c.l.b16 %v84
    %v367 = vunpack.c.h.b16 %v84
    %v368 = vunpack.c.l.b16 %v85
    %v369 = vunpack.c.h.b16 %v85
    %v370 = vunpack.c.l.b16 %v86
    %v371 = vunpack.c.h.b16 %v86
    %v372 = vunpack.c.l.b16 %v87
    %v373 = vunpack.c.h.b16 %v87
    %v374 = vunpack.c.l.b16 %v88
    %v375 = vunpack.c.h.b16 %v88
    %v376 = vunpack.c.l.b16 %v89
    %v377 = vunpack.c.h.b16 %v89
    %v378 = vunpack.c.l.b16 %v90
    %v379 = vunpack.c.h.b16 %v90
    %v380 = vunpack.c.l.b16 %v91
    %v381 = vunpack.c.h.b16 %v91
    %v382 = vunpack.c.l.b16 %v92
    %v383 = vunpack.c.h.b16 %v92
    %v384 = vunpack.c.l.b16 %v93
    %v385 = vunpack.c.h.b16 %v93
    %v386 = vunpack.c.l.b16 %v94
    %v387 = vunpack.c.h.b16 %v94
    %v388 = vunpack.c.l.b16 %v95
    %v389 = vunpack.c.h.b16 %v95
    %v390 = vunpack.c.l.b16 %v96
    %v391 = vunpack.c.h.b16 %v96
    %v392 = vunpack.c.l.b16 %v97
    %v393 = vunpack.c.h.b16 %v97
    %v394 = vunpack.c.l.b16 %v98
    %v395 = vunpack.c.h.b16 %v98
    %v396 = vunpack.c.l.b16 %v99
    %v397 = vunpack.c.h.b16 %v99
    %v398 = vunpack.c.l.b16 %v100
    %v399 = vunpack.c.h.b16 %v100
    %v400 = vunpack.c.l.b16 %v101
    %v401 = vunpack.c.h.b16 %v101
    %v402 = vunpack.c.l.b16 %v102
    %v403 = vunpack.c.h.b16 %v102
    %v404 = vunpack.c.l.b16 %v103
    %v405 = vunpack.c.h.b16 %v103
    %v406 = vunpack.c.l.b16 %v104
    %v407 = vunpack.c.h.b16 %v104
    %v408 = vunpack.c.l.b16 %v105
    %v409 = vunpack.c.h.b16 %v105
    %v410 = vunpack.c.l.b16 %v106
    %v411 = vunpack.c.h.b16 %v106
    %v412 = vunpack.c.l.b16 %v107
    %v413 = vunpack.c.h.b16 %v107
    %v414 = vunpack.c.l.b16 %v108
    %v415 = vunpack.c.h.b16 %v108
    %v416 = vunpack.c.l.b16 %v109
    %v417 = vunpack.c.h.b16 %v109
    %v418 = vunpack.c.l.b16 %v110
    %v419 = vunpack.c.h.b16 %v110
    %v420 = vunpack.c.l.b16 %v111
    %v421 = vunpack.c.h.b16 %v111
    %v422 = vunpack.c.l.b16 %v112
    %v423 = vunpack.c.h.b16 %v112
    %v424 = vunpack.c.l.b16 %v113
    %v425 = vunpack.c.h.b16 %v113
    %v426 = vunpack.c.l.b16 %v114
    %v427 = vunpack.c.h.b16 %v114
    %v428 = vunpack.c.l.b16 %v115
    %v429 = vunpack.c.h.b16 %v115
    %v430 = vunpack.c.l.b16 %v116
    %v431 = vunpack.c.h.b16 %v116
    %v432 = vunpack.c.l.b16 %v117
    %v433 = vunpack.c.h.b16 %v117
    %v434 = vunpack.c.l.b16 %v118
    %v435 = vunpack.c.h.b16 %v118
    %v436 = vunpack.c.l.b16 %v119
    %v437 = vunpack.c.h.b16 %v119
    %v438 = vunpack.c.l.b16 %v120
    %v439 = vunpack.c.h.b16 %v120
    %v440 = vunpack.c.l.b16 %v121
    %v441 = vunpack.c.h.b16 %v121
    %v442 = vunpack.c.l.b16 %v122
    %v443 = vunpack.c.h.b16 %v122
    %v444 = vunpack.c.l.b16 %v123
    %v445 = vunpack.c.h.b16 %v123
    %v446 = vunpack.c.l.b16 %v124
    %v447 = vunpack.c.h.b16 %v124
    %v448 = vunpack.c.l.b16 %v125
    %v449 = vunpack.c.h.b16 %v125
    %v450 = vunpack.c.l.b16 %v126
    %v451 = vunpack.c.h.b16 %v126
    %v452 = vunpack.c.l.b16 %v127
    %v453 = vunpack.c.h.b16 %v127
    %v454 = vunpack.c.l.b16 %v128
    %v455 = vunpack.c.h.b16 %v128
    %v456 = vunpack.c.l.b16 %v129
    %v457 = vunpack.c.h.b16 %v129
    %v458 = vunpack.c.l.b16 %v130
    %v459 = vunpack.c.h.b16 %v130
    %v460 = vunpack.c.l.b16 %v131
    %v461 = vunpack.c.h.b16 %v131
    %v462 = vunpack.c.l.b16 %v132
    %v463 = vunpack.c.h.b16 %v132
    %v464 = vunpack.c.l.b16 %v133
    %v465 = vunpack.c.h.b16 %v133
    %v466 = vunpack.c.l.b16 %v134
    %v467 = vunpack.c.h.b16 %v134
    %v468 = vunpack.c.l.b16 %v135
    %v469 = vunpack.c.h.b16 %v135
    %v470 = vunpack.c.l.b16 %v136
    %v471 = vunpack.c.h.b16 %v136
    %v472 = vunpack.c.l.b16 %v137
    %v473 = vunpack.c.h.b16 %v137
    %v474 = vunpack.c.l.b16 %v138
    %v475 = vunpack.c.h.b16 %v138
    %v476 = vunpack.c.l.b16 %v139
    %v477 = vunpack.c.h.b16 %v139
    %v478 = vunpack.c.l.b16 %v140
    %v479 = vunpack.c.h.b16 %v140
    %v480 = vunpack.c.l.b16 %v141
    %v481 = vunpack.c.h.b16 %v141
    %v482 = vunpack.c.l.b16 %v142
    %v483 = vunpack.c.h.b16 %v142
    %v484 = vunpack.c.l.b16 %v143
    %v485 = vunpack.c.h.b16 %v143
    %v486 = vunpack.c.l.b16 %v144
    %v487 = vunpack.c.h.b16 %v144
    %v488 = vunpack.c.l.b16 %v145
    %v489 = vunpack.c.h.b16 %v145
    %v490 = vunpack.c.l.b16 %v146
    %v491 = vunpack.c.h.b16 %v146
    %v492 = vunpack.c.l.b16 %v147
    %v493 = vunpack.c.h.b16 %v147
    %v494 = vunpack.c.l.b16 %v148
    %v495 = vunpack.c.h.b16 %v148
    %v496 = vunpack.c.l.b16 %v149
    %v497 = vunpack.c.h.b16 %v149
    %v498 = vunpack.c.l.b16 %v150
    %v499 = vunpack.c.h.b16 %v150
    %v500 = vunpack.c.l.b16 %v151
    %v501 = vunpack.c.h.b16 %v151
    %v502 = vunpack.c.l.b16 %v152
    %v503 = vunpack.c.h.b16 %v152
    %v504 = vunpack.c.l.b16 %v153
    %v505 = vunpack.c.h.b16 %v153
    %v506 = vunpack.c.l.b16 %v154
    %v507 = vunpack.c.h.b16 %v154
    %v508 = vunpack.c.l.b16 %v155
    %v509 = vunpack.c.h.b16 %v155
    %v510 = vunpack.c.l.b16 %v156
    %v511 = vunpack.c.h.b16 %v156
    %v512 = vunpack.c.l.b16 %v157
    %v513 = vunpack.c.h.b16 %v157
    %v514 = vunpack.c.l.b16 %v158
    %v515 = vunpack.c.h.b16 %v158
    %v516 = vunpack.c.l.b16 %v159
    %v517 = vunpack.c.h.b16 %v159
    %v518 = vunpack.c.l.b16 %v160
    %v519 = vunpack.c.h.b16 %v160
    %v520 = vunpack.c.l.b16 %v161
    %v521 = vunpack.c.h.b16 %v161
    %v522 = vunpack.c.l.b16 %v162
    %v523 = vunpack.c.h.b16 %v162
    %v524 = vunpack.c.l.b16 %v163
    %v525 = vunpack.c.h.b16 %v163
    %v526 = vunpack.c.l.b16 %v164
    %v527 = vunpack.c.h.b16 %v164
    %v528 = vunpack.c.l.b16 %v165
    %v529 = vunpack.c.h.b16 %v165
    %v530 = vunpack.c.l.b16 %v166
    %v531 = vunpack.c.h.b16 %v166
    %v532 = vunpack.c.l.b16 %v167
    %v533 = vunpack.c.h.b16 %v167
    %v534 = vunpack.c.l.b16 %v168
    %v535 = vunpack.c.h.b16 %v168
    %v536 = vunpack.c.l.b16 %v169
    %v537 = vunpack.c.h.b16 %v169
    %v538 = vunpack.c.l.b16 %v170
    %v539 = vunpack.c.h.b16 %v170
    %v540 = vunpack.c.l.b16 %v171
    %v541 = vunpack.c.h.b16 %v171
    %v542 = vunpack.c.l.b16 %v172
    %v543 = vunpack.c.h.b16 %v172
    %v544 = vunpack.c.l.b16 %v173
    %v545 = vunpack.c.h.b16 %v173
    %v546 = vunpack.c.l.b16 %v174
    %v547 = vunpack.c.h.b16 %v174
    %v548 = vunpack.c.l.b16 %v175
    %v549 = vunpack.c.h.b16 %v175
    %v550 = vunpack.c.l.b16 %v176
    %v551 = vunpack.c.h.b16 %v176
    %v552 = vunpack.c.l.b16 %v177
    %v553 = vunpack.c.h.b16 %v177
    %v554 = vunpack.c.l.b16 %v178
    %v555 = vunpack.c.h.b16 %v178
    %v556 = vunpack.c.l.b16 %v179
    %v557 = vunpack.c.h.b16 %v179
    %v558 = vunpack.c.l.b16 %v180
    %v559 = vunpack.c.h.b16 %v180
    %v560 = vunpack.c.l.b16 %v181
    %v561 = vunpack.c.h.b16 %v181
    %v562 = vunpack.c.l.b16 %v182
    %v563 = vunpack.c.h.b16 %v182
    %v564 = vunpack.c.l.b16 %v183
    %v565 = vunpack.c.h.b16 %v183
    %v566 = vunpack.c.l.b16 %v184
    %v567 = vunpack.c.h.b16 %v184
    %v568 = vunpack.c.l.b16 %v185
    %v569 = vunpack.c.h.b16 %v185
    %v570 = vunpack.c.l.b16 %v186
    %v571 = vunpack.c.h.b16 %v186
    %v572 = vunpack.c.l.b16 %v187
    %v573 = vunpack.c.h.b16 %v187
    %v574 = vunpack.c.l.b16 %v188
    %v575 = vunpack.c.h.b16 %v188
    %v576 = vunpack.c.l.b16 %v189
    %v577 = vunpack.c.h.b16 %v189
    %v578 = vunpack.c.l.b16 %v190
    %v579 = vunpack.c.h.b16 %v190
    %v580 = vunpack.c.l.b16 %v191
    %v581 = vunpack.c.h.b16 %v191
    %v582 = vunpack.c.l.b16 %v192
    %v583 = vunpack.c.h.b16 %v192
    %v584 = vunpack.c.l.b16 %v193
    %v585 = vunpack.c.h.b16 %v193
    %v586 = vunpack.c.l.b16 %v194
    %v587 = vunpack.c.h.b16 %v194
    %v588 = vunpack.c.l.b16 %v195
    %v589 = vunpack.c.h.b16 %v195
    %v590 = vunpack.c.l.b16 %v196
    %v591 = vunpack.c.h.b16 %v196
    %v592 = vunpack.c.l.b16 %v197
    %v593 = vunpack.c.h.b16 %v197
    %v594 = vunpack.c.l.b16 %v198
    %v595 = vunpack.c.h.b16 %v198
    %v596 = vunpack.c.l.b16 %v199
    %v597 = vunpack.c.h.b16 %v199
    %v598 = vunpack.c.l.b16 %v200
    %v599 = vunpack.c.h.b16 %v200
    %v600 = vunpack.c.l.b16 %v201
    %v601 = vunpack.c.h.b16 %v201
    %v602 = vunpack.c.l.b16 %v202
    %v603 = vunpack.c.h.b16 %v202
    %v604 = vunpack.c.l.b16 %v203
    %v605 = vunpack.c.h.b16 %v203
    %v606 = vunpack.c.l.b16 %v204
    %v607 = vunpack.c.h.b16 %v204
    %v608 = vunpack.c.l.b16 %v205
    %v609 = vunpack.c.h.b16 %v205
    %v610 = vunpack.c.l.b16 %v206
    %v611 = vunpack.c.h.b16 %v206
    %v612 = vunpack.c.l.b16 %v207
    %v613 = vunpack.c.h.b16 %v207
    %v614 = vpack.c.b16 %v362, %v358
    %v615 = vpack.c.b16 %v363, %v359
    %v616 = vpack.c.b16 %v364, %v360
    %v617 = vpack.c.b16 %v365, %v361
    %v618 = vpack.c.b16 %v370, %v366
    %v619 = vpack.c.b16 %v371, %v367
    %v620 = vpack.c.b16 %v372, %v368
    %v621 = vpack.c.b16 %v373, %v369
    %v622 = vpack.c.b16 %v378, %v374
    %v623 = vpack.c.b16 %v379, %v375
    %v624 = vpack.c.b16 %v380, %v376
    %v625 = vpack.c.b16 %v381, %v377
    %v626 = vpack.c.b16 %v386, %v382
    %v627 = vpack.c.b16 %v387, %v383
    %v628 = vpack.c.b16 %v388, %v384
    %v629 = vpack.c.b16 %v389, %v385
    %v630 = vpack.c.b16 %v394, %v390
    %v631 = vpack.c.b16 %v395, %v391
    %v632 = vpack.c.b16 %v396, %v392
    %v633 = vpack.c.b16 %v397, %v393
    %v634 = vpack.c.b16 %v402, %v398
    %v635 = vpack.c.b16 %v403, %v399
    %v636 = vpack.c.b16 %v404, %v400
    %v637 = vpack.c.b16 %v405, %v401
    %v638 = vpack.c.b16 %v410, %v406
    %v639 = vpack.c.b16 %v411, %v407
    %v640 = vpack.c.b16 %v412, %v408
    %v641 = vpack.c.b16 %v413, %v409
    %v642 = vpack.c.b16 %v418, %v414
    %v643 = vpack.c.b16 %v419, %v415
    %v644 = vpack.c.b16 %v420, %v416
    %v645 = vpack.c.b16 %v421, %v417
    %v646 = vpack.c.b16 %v426, %v422
    %v647 = vpack.c.b16 %v427, %v423
    %v648 = vpack.c.b16 %v428, %v424
    %v649 = vpack.c.b16 %v429, %v425
    %v650 = vpack.c.b16 %v434, %v430
    %v651 = vpack.c.b16 %v435, %v431
    %v652 = vpack.c.b16 %v436, %v432
    %v653 = vpack.c.b16 %v437, %v433
    %v654 = vpack.c.b16 %v442, %v438
    %v655 = vpack.c.b16 %v443, %v439
    %v656 = vpack.c.b16 %v444, %v440
    %v657 = vpack.c.b16 %v445, %v441
    %v658 = vpack.c.b16 %v450, %v446
    %v659 = vpack.c.b16 %v451, %v447
    %v660 = vpack.c.b16 %v452, %v448
    %v661 = vpack.c.b16 %v453, %v449
    %v662 = vpack.c.b16 %v458, %v454
    %v663 = vpack.c.b16 %v459, %v455
    %v664 = vpack.c.b16 %v460, %v456
    %v665 = vpack.c.b16 %v461, %v457
    %v666 = vpack.c.b16 %v466, %v462
    %v667 = vpack.c.b16 %v467, %v463
    %v668 = vpack.c.b16 %v468, %v464
    %v669 = vpack.c.b16 %v469, %v465
    %v670 = vpack.c.b16 %v474, %v470
    %v671 = vpack.c.b16 %v475, %v471
    %v672 = vpack.c.b16 %v476, %v472
    %v673 = vpack.c.b16 %v477, %v473
    %v674 = vpack.c.b16 %v482, %v478
    %v675 = vpack.c.b16 %v483, %v479
    %v676 = vpack.c.b16 %v484, %v480
    %v677 = vpack.c.b16 %v485, %v481
    %v678 = vpack.c.b16 %v490, %v486
    %v679 = vpack.c.b16 %v491, %v487
    %v680 = vpack.c.b16 %v492, %v488
    %v681 = vpack.c.b16 %v493, %v489
    %v682 = vpack.c.b16 %v498, %v494
    %v683 = vpack.c.b16 %v499, %v495
    %v684 = vpack.c.b16 %v500, %v496
    %v685 = vpack.c.b16 %v501, %v497
    %v686 = vpack.c.b16 %v506, %v502
    %v687 = vpack.c.b16 %v507, %v503
    %v688 = vpack.c.b16 %v508, %v504
    %v689 = vpack.c.b16 %v509, %v505
    %v690 = vpack.c.b16 %v514, %v510
    %v691 = vpack.c.b16 %v515, %v511
    %v692 = vpack.c.b16 %v516, %v512
    %v693 = vpack.c.b16 %v517, %v513
    %v694 = vpack.c.b16 %v522, %v518
    %v695 = vpack.c.b16 %v523, %v519
    %v696 = vpack.c.b16 %v524, %v520
    %v697 = vpack.c.b16 %v525, %v521
    %v698 = vpack.c.b16 %v530, %v526
    %v699 = vpack.c.b16 %v531, %v527
    %v700 = vpack.c.b16 %v532, %v528
    %v701 = vpack.c.b16 %v533, %v529
    %v702 = vpack.c.b16 %v538, %v534
    %v703 = vpack.c.b16 %v539, %v535
    %v704 = vpack.c.b16 %v540, %v536
    %v705 = vpack.c.b16 %v541, %v537
    %v706 = vpack.c.b16 %v546, %v542
    %v707 = vpack.c.b16 %v547, %v543
    %v708 = vpack.c.b16 %v548, %v544
    %v709 = vpack.c.b16 %v549, %v545
    %v710 = vpack.c.b16 %v554, %v550
    %v711 = vpack.c.b16 %v555, %v551
    %v712 = vpack.c.b16 %v556, %v552
    %v713 = vpack.c.b16 %v557, %v553
    %v714 = vpack.c.b16 %v562, %v558
    %v715 = vpack.c.b16 %v563, %v559
    %v716 = vpack.c.b16 %v564, %v560
    %v717 = vpack.c.b16 %v565, %v561
    %v718 = vpack.c.b16 %v570, %v566
    %v719 = vpack.c.b16 %v571, %v567
    %v720 = vpack.c.b16 %v572, %v568
    %v721 = vpack.c.b16 %v573, %v569
    %v722 = vpack.c.b16 %v578, %v574
    %v723 = vpack.c.b16 %v579, %v575
    %v724 = vpack.c.b16 %v580, %v576
    %v725 = vpack.c.b16 %v581, %v577
    %v726 = vpack.c.b16 %v586, %v582
    %v727 = vpack.c.b16 %v587, %v583
    %v728 = vpack.c.b16 %v588, %v584
    %v729 = vpack.c.b16 %v589, %v585
    %v730 = vpack.c.b16 %v594, %v590
    %v731 = vpack.c.b16 %v595, %v591
    %v732 = vpack.c.b16 %v596, %v592
    %v733 = vpack.c.b16 %v597, %v593
    %v734 = vpack.c.b16 %v602, %v598
    %v735 = vpack.c.b16 %v603, %v599
    %v736 = vpack.c.b16 %v604, %v600
    %v737 = vpack.c.b16 %v605, %v601
    %v738 = vpack.c.b16 %v610, %v606
    %v739 = vpack.c.b16 %v611, %v607
    %v740 = vpack.c.b16 %v612, %v608
    %v741 = vpack.c.b16 %v613, %v609
    %870 = vmatprep.subr.bf16.mxu0 %v615
    %871 = vmatpush1.bf16.msra.mxu0 %v614
    %872 = vmatprep.subr.bf16.mxu0 %v619
    %873 = vmatpush1.bf16.msra.mxu0 %v618
    %874 = vmatprep.subr.bf16.mxu0 %v623
    %875 = vmatpush1.bf16.msra.mxu0 %v622
    %876 = vmatprep.subr.bf16.mxu0 %v627
    %877 = vmatpush1.bf16.msra.mxu0 %v626
    %878 = vmatprep.subr.bf16.mxu0 %v631
    %879 = vmatpush1.bf16.msra.mxu0 %v630
    %880 = vmatprep.subr.bf16.mxu0 %v635
    %881 = vmatpush1.bf16.msra.mxu0 %v634
    %882 = vmatprep.subr.bf16.mxu0 %v639
    %883 = vmatpush1.bf16.msra.mxu0 %v638
    %884 = vmatprep.subr.bf16.mxu0 %v643
    %885 = vmatpush1.bf16.msra.mxu0 %v642
    %886 = vmatprep.subr.bf16.mxu0 %v647
    %887 = vmatpush1.bf16.msra.mxu0 %v646
    %888 = vmatprep.subr.bf16.mxu0 %v651
    %889 = vmatpush1.bf16.msra.mxu0 %v650
    %890 = vmatprep.subr.bf16.mxu0 %v655
    %891 = vmatpush1.bf16.msra.mxu0 %v654
    %892 = vmatprep.subr.bf16.mxu0 %v659
    %893 = vmatpush1.bf16.msra.mxu0 %v658
    %894 = vmatprep.subr.bf16.mxu0 %v663
    %895 = vmatpush1.bf16.msra.mxu0 %v662
    %896 = vmatprep.subr.bf16.mxu0 %v667
    %897 = vmatpush1.bf16.msra.mxu0 %v666
    %898 = vmatprep.subr.bf16.mxu0 %v671
    %899 = vmatpush1.bf16.msra.mxu0 %v670
    %900 = vmatprep.subr.bf16.mxu0 %v675
    %901 = vmatpush1.bf16.msra.mxu0 %v674
    %902 = vmatprep.mubr.bf16.mxu0 %v77
    %903 = vmatmul.mubr.bf16.gmra.mrb[0].mxu0 %v76
    %v904 = vpop.f32.mrb[0].mxu0
    %v905 = vadd.f32 %v213, %v904
    %v906 = vpop.f32.mrb[0].mxu0
    %v907 = vadd.f32 %v217, %v906
    %v908 = vpop.f32.mrb[0].mxu0
    %v909 = vadd.f32 %v213, %v908
    %v910 = vpop.f32.mrb[0].mxu0
    %v911 = vadd.f32 %v217, %v910
    %912 = vdwg.mxu0
    %913 = vmatprep.subr.bf16.mxu0 %v679
    %914 = vmatpush1.bf16.msra.mxu0 %v678
    %915 = vmatprep.subr.bf16.mxu0 %v683
    %916 = vmatpush1.bf16.msra.mxu0 %v682
    %917 = vmatprep.subr.bf16.mxu0 %v687
    %918 = vmatpush1.bf16.msra.mxu0 %v686
    %919 = vmatprep.subr.bf16.mxu0 %v691
    %920 = vmatpush1.bf16.msra.mxu0 %v690
    %921 = vmatprep.subr.bf16.mxu0 %v695
    %922 = vmatpush1.bf16.msra.mxu0 %v694
    %923 = vmatprep.subr.bf16.mxu0 %v699
    %924 = vmatpush1.bf16.msra.mxu0 %v698
    %925 = vmatprep.subr.bf16.mxu0 %v703
    %926 = vmatpush1.bf16.msra.mxu0 %v702
    %927 = vmatprep.subr.bf16.mxu0 %v707
    %928 = vmatpush1.bf16.msra.mxu0 %v706
    %929 = vmatprep.subr.bf16.mxu0 %v711
    %930 = vmatpush1.bf16.msra.mxu0 %v710
    %931 = vmatprep.subr.bf16.mxu0 %v715
    %932 = vmatpush1.bf16.msra.mxu0 %v714
    %933 = vmatprep.subr.bf16.mxu0 %v719
    %934 = vmatpush1.bf16.msra.mxu0 %v718
    %935 = vmatprep.subr.bf16.mxu0 %v723
    %936 = vmatpush1.bf16.msra.mxu0 %v722
    %937 = vmatprep.subr.bf16.mxu0 %v727
    %938 = vmatpush1.bf16.msra.mxu0 %v726
    %939 = vmatprep.subr.bf16.mxu0 %v731
    %940 = vmatpush1.bf16.msra.mxu0 %v730
    %941 = vmatprep.subr.bf16.mxu0 %v735
    %942 = vmatpush1.bf16.msra.mxu0 %v734
    %943 = vmatprep.subr.bf16.mxu0 %v739
    %944 = vmatpush1.bf16.msra.mxu0 %v738
    %945 = vmatprep.mubr.bf16.mxu0 %v79
    %946 = vmatmul.mubr.bf16.gmra.mrb[0].mxu0 %v78
    %v947 = vpop.f32.mrb[0].mxu0
    %v948 = vadd.f32 %v905, %v947
    %v949 = vpop.f32.mrb[0].mxu0
    %v950 = vadd.f32 %v907, %v949
    %v951 = vpop.f32.mrb[0].mxu0
    %v952 = vadd.f32 %v909, %v951
    %v953 = vpop.f32.mrb[0].mxu0
    %v954 = vadd.f32 %v911, %v953
    %955 = vdwg.mxu0
    %956 = vmatprep.subr.bf16.mxu0 %v617
    %957 = vmatpush1.bf16.msra.mxu0 %v616
    %958 = vmatprep.subr.bf16.mxu0 %v621
    %959 = vmatpush1.bf16.msra.mxu0 %v620
    %960 = vmatprep.subr.bf16.mxu0 %v625
    %961 = vmatpush1.bf16.msra.mxu0 %v624
    %962 = vmatprep.subr.bf16.mxu0 %v629
    %963 = vmatpush1.bf16.msra.mxu0 %v628
    %964 = vmatprep.subr.bf16.mxu0 %v633
    %965 = vmatpush1.bf16.msra.mxu0 %v632
    %966 = vmatprep.subr.bf16.mxu0 %v637
    %967 = vmatpush1.bf16.msra.mxu0 %v636
    %968 = vmatprep.subr.bf16.mxu0 %v641
    %969 = vmatpush1.bf16.msra.mxu0 %v640
    %970 = vmatprep.subr.bf16.mxu0 %v645
    %971 = vmatpush1.bf16.msra.mxu0 %v644
    %972 = vmatprep.subr.bf16.mxu0 %v649
    %973 = vmatpush1.bf16.msra.mxu0 %v648
    %974 = vmatprep.subr.bf16.mxu0 %v653
    %975 = vmatpush1.bf16.msra.mxu0 %v652
    %976 = vmatprep.subr.bf16.mxu0 %v657
    %977 = vmatpush1.bf16.msra.mxu0 %v656
    %978 = vmatprep.subr.bf16.mxu0 %v661
    %979 = vmatpush1.bf16.msra.mxu0 %v660
    %980 = vmatprep.subr.bf16.mxu0 %v665
    %981 = vmatpush1.bf16.msra.mxu0 %v664
    %982 = vmatprep.subr.bf16.mxu0 %v669
    %983 = vmatpush1.bf16.msra.mxu0 %v668
    %984 = vmatprep.subr.bf16.mxu0 %v673
    %985 = vmatpush1.bf16.msra.mxu0 %v672
    %986 = vmatprep.subr.bf16.mxu0 %v677
    %987 = vmatpush1.bf16.msra.mxu0 %v676
    %988 = vmatprep.mubr.bf16.mxu0 %v77
    %989 = vmatmul.mubr.bf16.gmra.mrb[0].mxu0 %v76
    %v990 = vpop.f32.mrb[0].mxu0
    %v991 = vadd.f32 %v221, %v990
    %v992 = vpop.f32.mrb[0].mxu0
    %v993 = vadd.f32 %v225, %v992
    %v994 = vpop.f32.mrb[0].mxu0
    %v995 = vadd.f32 %v221, %v994
    %v996 = vpop.f32.mrb[0].mxu0
    %v997 = vadd.f32 %v225, %v996
    %998 = vdwg.mxu0
    %999 = vmatprep.subr.bf16.mxu0 %v681
    %1000 = vmatpush1.bf16.msra.mxu0 %v680
    %1001 = vmatprep.subr.bf16.mxu0 %v685
    %1002 = vmatpush1.bf16.msra.mxu0 %v684
    %1003 = vmatprep.subr.bf16.mxu0 %v689
    %1004 = vmatpush1.bf16.msra.mxu0 %v688
    %1005 = vmatprep.subr.bf16.mxu0 %v693
    %1006 = vmatpush1.bf16.msra.mxu0 %v692
    %1007 = vmatprep.subr.bf16.mxu0 %v697
    %1008 = vmatpush1.bf16.msra.mxu0 %v696
    %1009 = vmatprep.subr.bf16.mxu0 %v701
    %1010 = vmatpush1.bf16.msra.mxu0 %v700
    %1011 = vmatprep.subr.bf16.mxu0 %v705
    %1012 = vmatpush1.bf16.msra.mxu0 %v704
    %1013 = vmatprep.subr.bf16.mxu0 %v709
    %1014 = vmatpush1.bf16.msra.mxu0 %v708
    %1015 = vmatprep.subr.bf16.mxu0 %v713
    %1016 = vmatpush1.bf16.msra.mxu0 %v712
    %1017 = vmatprep.subr.bf16.mxu0 %v717
    %1018 = vmatpush1.bf16.msra.mxu0 %v716
    %1019 = vmatprep.subr.bf16.mxu0 %v721
    %1020 = vmatpush1.bf16.msra.mxu0 %v720
    %1021 = vmatprep.subr.bf16.mxu0 %v725
    %1022 = vmatpush1.bf16.msra.mxu0 %v724
    %1023 = vmatprep.subr.bf16.mxu0 %v729
    %1024 = vmatpush1.bf16.msra.mxu0 %v728
    %1025 = vmatprep.subr.bf16.mxu0 %v733
    %1026 = vmatpush1.bf16.msra.mxu0 %v732
    %1027 = vmatprep.subr.bf16.mxu0 %v737
    %1028 = vmatpush1.bf16.msra.mxu0 %v736
    %1029 = vmatprep.subr.bf16.mxu0 %v741
    %1030 = vmatpush1.bf16.msra.mxu0 %v740
    %1031 = vmatprep.mubr.bf16.mxu0 %v79
    %1032 = vmatmul.mubr.bf16.gmra.mrb[0].mxu0 %v78
    %v1033 = vpop.f32.mrb[0].mxu0
    %v1034 = vadd.f32 %v991, %v1033
    %v1035 = vpop.f32.mrb[0].mxu0
    %v1036 = vadd.f32 %v993, %v1035
    %v1037 = vpop.f32.mrb[0].mxu0
    %v1038 = vadd.f32 %v995, %v1037
    %v1039 = vpop.f32.mrb[0].mxu0
    %v1040 = vadd.f32 %v997, %v1039
    %1041 = vdwg.mxu0
    %v1042 = vmax.f32 %v948, 0.0
    %v1043 = vmax.f32 %v950, 0.0
    %v1044 = vmax.f32 %v1034, 0.0
    %v1045 = vmax.f32 %v1036, 0.0
    %v1046 = vmax.f32 %v952, 0.0
    %v1047 = vmax.f32 %v954, 0.0
    %v1048 = vmax.f32 %v1038, 0.0
    %v1049 = vmax.f32 %v1040, 0.0
    %v1050 = vpack.c.bf16 %v1046, %v1042
    %v1051 = vpack.c.bf16 %v1047, %v1043
    %v1052 = vpack.c.bf16 %v1048, %v1044
    %v1053 = vpack.c.bf16 %v1049, %v1045
    %v1054 = vld [vmem:[#allocation4] sm:$0xff]
    %v1055 = vld [vmem:[#allocation4 + $0x8] sm:$0xff]
    %v1056 = vld [vmem:[#allocation4 + $0x10] sm:$0xff]
    %v1057 = vld [vmem:[#allocation4 + $0x18] sm:$0xff]
    %v1058 = vld [vmem:[#allocation4 + $0x20] sm:$0xff]
    %v1059 = vld [vmem:[#allocation4 + $0x28] sm:$0xff]
    %v1060 = vld [vmem:[#allocation4 + $0x30] sm:$0xff]
    %v1061 = vld [vmem:[#allocation4 + $0x38] sm:$0xff]
    %v1062 = vld [vmem:[#allocation4 + $0x40] sm:$0xff]
    %v1063 = vld [vmem:[#allocation4 + $0x48] sm:$0xff]
    %v1064 = vld [vmem:[#allocation4 + $0x50] sm:$0xff]
    %v1065 = vld [vmem:[#allocation4 + $0x58] sm:$0xff]
    %v1066 = vld [vmem:[#allocation4 + $0x60] sm:$0xff]
    %v1067 = vld [vmem:[#allocation4 + $0x68] sm:$0xff]
    %v1068 = vld [vmem:[#allocation4 + $0x70] sm:$0xff]
    %v1069 = vld [vmem:[#allocation4 + $0x78] sm:$0xff]
    %v1070 = vld [vmem:[#allocation4 + $0x80] sm:$0xff]
    %v1071 = vld [vmem:[#allocation4 + $0x88] sm:$0xff]
    %v1072 = vld [vmem:[#allocation4 + $0x90] sm:$0xff]
    %v1073 = vld [vmem:[#allocation4 + $0x98] sm:$0xff]
    %v1074 = vld [vmem:[#allocation4 + $0xa0] sm:$0xff]
    %v1075 = vld [vmem:[#allocation4 + $0xa8] sm:$0xff]
    %v1076 = vld [vmem:[#allocation4 + $0xb0] sm:$0xff]
    %v1077 = vld [vmem:[#allocation4 + $0xb8] sm:$0xff]
    %v1078 = vld [vmem:[#allocation4 + $0xc0] sm:$0xff]
    %v1079 = vld [vmem:[#allocation4 + $0xc8] sm:$0xff]
    %v1080 = vld [vmem:[#allocation4 + $0xd0] sm:$0xff]
    %v1081 = vld [vmem:[#allocation4 + $0xd8] sm:$0xff]
    %v1082 = vld [vmem:[#allocation4 + $0xe0] sm:$0xff]
    %v1083 = vld [vmem:[#allocation4 + $0xe8] sm:$0xff]
    %v1084 = vld [vmem:[#allocation4 + $0xf0] sm:$0xff]
    %v1085 = vld [vmem:[#allocation4 + $0xf8] sm:$0xff]
    %v1086 = vld [vmem:[#allocation4 + $0x100] sm:$0xff]
    %v1087 = vld [vmem:[#allocation4 + $0x108] sm:$0xff]
    %v1088 = vld [vmem:[#allocation4 + $0x110] sm:$0xff]
    %v1089 = vld [vmem:[#allocation4 + $0x118] sm:$0xff]
    %v1090 = vld [vmem:[#allocation4 + $0x120] sm:$0xff]
    %v1091 = vld [vmem:[#allocation4 + $0x128] sm:$0xff]
    %v1092 = vld [vmem:[#allocation4 + $0x130] sm:$0xff]
    %v1093 = vld [vmem:[#allocation4 + $0x138] sm:$0xff]
    %v1094 = vld [vmem:[#allocation4 + $0x140] sm:$0xff]
    %v1095 = vld [vmem:[#allocation4 + $0x148] sm:$0xff]
    %v1096 = vld [vmem:[#allocation4 + $0x150] sm:$0xff]
    %v1097 = vld [vmem:[#allocation4 + $0x158] sm:$0xff]
    %v1098 = vld [vmem:[#allocation4 + $0x160] sm:$0xff]
    %v1099 = vld [vmem:[#allocation4 + $0x168] sm:$0xff]
    %v1100 = vld [vmem:[#allocation4 + $0x170] sm:$0xff]
    %v1101 = vld [vmem:[#allocation4 + $0x178] sm:$0xff]
    %v1102 = vld [vmem:[#allocation4 + $0x180] sm:$0xff]
    %v1103 = vld [vmem:[#allocation4 + $0x188] sm:$0xff]
    %v1104 = vld [vmem:[#allocation4 + $0x190] sm:$0xff]
    %v1105 = vld [vmem:[#allocation4 + $0x198] sm:$0xff]
    %v1106 = vld [vmem:[#allocation4 + $0x1a0] sm:$0xff]
    %v1107 = vld [vmem:[#allocation4 + $0x1a8] sm:$0xff]
    %v1108 = vld [vmem:[#allocation4 + $0x1b0] sm:$0xff]
    %v1109 = vld [vmem:[#allocation4 + $0x1b8] sm:$0xff]
    %v1110 = vld [vmem:[#allocation4 + $0x1c0] sm:$0xff]
    %v1111 = vld [vmem:[#allocation4 + $0x1c8] sm:$0xff]
    %v1112 = vld [vmem:[#allocation4 + $0x1d0] sm:$0xff]
    %v1113 = vld [vmem:[#allocation4 + $0x1d8] sm:$0xff]
    %v1114 = vld [vmem:[#allocation4 + $0x1e0] sm:$0xff]
    %v1115 = vld [vmem:[#allocation4 + $0x1e8] sm:$0xff]
    %v1116 = vld [vmem:[#allocation4 + $0x1f0] sm:$0xff]
    %v1117 = vld [vmem:[#allocation4 + $0x1f8] sm:$0xff]
    %v1118 = vld [vmem:[#allocation4 + $0x200] sm:$0xff]
    %v1119 = vld [vmem:[#allocation4 + $0x208] sm:$0xff]
    %v1120 = vld [vmem:[#allocation4 + $0x210] sm:$0xff]
    %v1121 = vld [vmem:[#allocation4 + $0x218] sm:$0xff]
    %v1122 = vld [vmem:[#allocation4 + $0x220] sm:$0xff]
    %v1123 = vld [vmem:[#allocation4 + $0x228] sm:$0xff]
    %v1124 = vld [vmem:[#allocation4 + $0x230] sm:$0xff]
    %v1125 = vld [vmem:[#allocation4 + $0x238] sm:$0xff]
    %v1126 = vld [vmem:[#allocation4 + $0x240] sm:$0xff]
    %v1127 = vld [vmem:[#allocation4 + $0x248] sm:$0xff]
    %v1128 = vld [vmem:[#allocation4 + $0x250] sm:$0xff]
    %v1129 = vld [vmem:[#allocation4 + $0x258] sm:$0xff]
    %v1130 = vld [vmem:[#allocation4 + $0x260] sm:$0xff]
    %v1131 = vld [vmem:[#allocation4 + $0x268] sm:$0xff]
    %v1132 = vld [vmem:[#allocation4 + $0x270] sm:$0xff]
    %v1133 = vld [vmem:[#allocation4 + $0x278] sm:$0xff]
    %v1134 = vld [vmem:[#allocation4 + $0x280] sm:$0xff]
    %v1135 = vld [vmem:[#allocation4 + $0x288] sm:$0xff]
    %v1136 = vld [vmem:[#allocation4 + $0x290] sm:$0xff]
    %v1137 = vld [vmem:[#allocation4 + $0x298] sm:$0xff]
    %v1138 = vld [vmem:[#allocation4 + $0x2a0] sm:$0xff]
    %v1139 = vld [vmem:[#allocation4 + $0x2a8] sm:$0xff]
    %v1140 = vld [vmem:[#allocation4 + $0x2b0] sm:$0xff]
    %v1141 = vld [vmem:[#allocation4 + $0x2b8] sm:$0xff]
    %v1142 = vld [vmem:[#allocation4 + $0x2c0] sm:$0xff]
    %v1143 = vld [vmem:[#allocation4 + $0x2c8] sm:$0xff]
    %v1144 = vld [vmem:[#allocation4 + $0x2d0] sm:$0xff]
    %v1145 = vld [vmem:[#allocation4 + $0x2d8] sm:$0xff]
    %v1146 = vld [vmem:[#allocation4 + $0x2e0] sm:$0xff]
    %v1147 = vld [vmem:[#allocation4 + $0x2e8] sm:$0xff]
    %v1148 = vld [vmem:[#allocation4 + $0x2f0] sm:$0xff]
    %v1149 = vld [vmem:[#allocation4 + $0x2f8] sm:$0xff]
    %v1150 = vld [vmem:[#allocation4 + $0x300] sm:$0xff]
    %v1151 = vld [vmem:[#allocation4 + $0x308] sm:$0xff]
    %v1152 = vld [vmem:[#allocation4 + $0x310] sm:$0xff]
    %v1153 = vld [vmem:[#allocation4 + $0x318] sm:$0xff]
    %v1154 = vld [vmem:[#allocation4 + $0x320] sm:$0xff]
    %v1155 = vld [vmem:[#allocation4 + $0x328] sm:$0xff]
    %v1156 = vld [vmem:[#allocation4 + $0x330] sm:$0xff]
    %v1157 = vld [vmem:[#allocation4 + $0x338] sm:$0xff]
    %v1158 = vld [vmem:[#allocation4 + $0x340] sm:$0xff]
    %v1159 = vld [vmem:[#allocation4 + $0x348] sm:$0xff]
    %v1160 = vld [vmem:[#allocation4 + $0x350] sm:$0xff]
    %v1161 = vld [vmem:[#allocation4 + $0x358] sm:$0xff]
    %v1162 = vld [vmem:[#allocation4 + $0x360] sm:$0xff]
    %v1163 = vld [vmem:[#allocation4 + $0x368] sm:$0xff]
    %v1164 = vld [vmem:[#allocation4 + $0x370] sm:$0xff]
    %v1165 = vld [vmem:[#allocation4 + $0x378] sm:$0xff]
    %v1166 = vld [vmem:[#allocation4 + $0x380] sm:$0xff]
    %v1167 = vld [vmem:[#allocation4 + $0x388] sm:$0xff]
    %v1168 = vld [vmem:[#allocation4 + $0x390] sm:$0xff]
    %v1169 = vld [vmem:[#allocation4 + $0x398] sm:$0xff]
    %v1170 = vld [vmem:[#allocation4 + $0x3a0] sm:$0xff]
    %v1171 = vld [vmem:[#allocation4 + $0x3a8] sm:$0xff]
    %v1172 = vld [vmem:[#allocation4 + $0x3b0] sm:$0xff]
    %v1173 = vld [vmem:[#allocation4 + $0x3b8] sm:$0xff]
    %v1174 = vld [vmem:[#allocation4 + $0x3c0] sm:$0xff]
    %v1175 = vld [vmem:[#allocation4 + $0x3c8] sm:$0xff]
    %v1176 = vld [vmem:[#allocation4 + $0x3d0] sm:$0xff]
    %v1177 = vld [vmem:[#allocation4 + $0x3d8] sm:$0xff]
    %v1178 = vld [vmem:[#allocation4 + $0x3e0] sm:$0xff]
    %v1179 = vld [vmem:[#allocation4 + $0x3e8] sm:$0xff]
    %v1180 = vld [vmem:[#allocation4 + $0x3f0] sm:$0xff]
    %v1181 = vld [vmem:[#allocation4 + $0x3f8] sm:$0xff]
    %v1182 = vld [vmem:[%s4] sm:$0xf]
    %v1184 = vlaneseq
    %v1185 = vshrl.u32 %v1184, 7
    %v1186 = vsub.s32 0, %v1185
    %v1187 = vrot.slane %v1182, %v1186
    %v1188 = vlaneseq
    %v1189 = vshrl.u32 %v1188, 7
    %v1190 = vsub.s32 1, %v1189
    %v1191 = vrot.slane %v1182, %v1190
    %v1192 = vlaneseq
    %v1193 = vshrl.u32 %v1192, 7
    %v1194 = vsub.s32 2, %v1193
    %v1195 = vrot.slane %v1182, %v1194
    %v1196 = vlaneseq
    %v1197 = vshrl.u32 %v1196, 7
    %v1198 = vsub.s32 3, %v1197
    %v1199 = vrot.slane %v1182, %v1198
    %v1332 = vunpack.c.l.b16 %v1054
    %v1333 = vunpack.c.h.b16 %v1054
    %v1334 = vunpack.c.l.b16 %v1055
    %v1335 = vunpack.c.h.b16 %v1055
    %v1336 = vunpack.c.l.b16 %v1056
    %v1337 = vunpack.c.h.b16 %v1056
    %v1338 = vunpack.c.l.b16 %v1057
    %v1339 = vunpack.c.h.b16 %v1057
    %v1340 = vunpack.c.l.b16 %v1058
    %v1341 = vunpack.c.h.b16 %v1058
    %v1342 = vunpack.c.l.b16 %v1059
    %v1343 = vunpack.c.h.b16 %v1059
    %v1344 = vunpack.c.l.b16 %v1060
    %v1345 = vunpack.c.h.b16 %v1060
    %v1346 = vunpack.c.l.b16 %v1061
    %v1347 = vunpack.c.h.b16 %v1061
    %v1348 = vunpack.c.l.b16 %v1062
    %v1349 = vunpack.c.h.b16 %v1062
    %v1350 = vunpack.c.l.b16 %v1063
    %v1351 = vunpack.c.h.b16 %v1063
    %v1352 = vunpack.c.l.b16 %v1064
    %v1353 = vunpack.c.h.b16 %v1064
    %v1354 = vunpack.c.l.b16 %v1065
    %v1355 = vunpack.c.h.b16 %v1065
    %v1356 = vunpack.c.l.b16 %v1066
    %v1357 = vunpack.c.h.b16 %v1066
    %v1358 = vunpack.c.l.b16 %v1067
    %v1359 = vunpack.c.h.b16 %v1067
    %v1360 = vunpack.c.l.b16 %v1068
    %v1361 = vunpack.c.h.b16 %v1068
    %v1362 = vunpack.c.l.b16 %v1069
    %v1363 = vunpack.c.h.b16 %v1069
    %v1364 = vunpack.c.l.b16 %v1070
    %v1365 = vunpack.c.h.b16 %v1070
    %v1366 = vunpack.c.l.b16 %v1071
    %v1367 = vunpack.c.h.b16 %v1071
    %v1368 = vunpack.c.l.b16 %v1072
    %v1369 = vunpack.c.h.b16 %v1072
    %v1370 = vunpack.c.l.b16 %v1073
    %v1371 = vunpack.c.h.b16 %v1073
    %v1372 = vunpack.c.l.b16 %v1074
    %v1373 = vunpack.c.h.b16 %v1074
    %v1374 = vunpack.c.l.b16 %v1075
    %v1375 = vunpack.c.h.b16 %v1075
    %v1376 = vunpack.c.l.b16 %v1076
    %v1377 = vunpack.c.h.b16 %v1076
    %v1378 = vunpack.c.l.b16 %v1077
    %v1379 = vunpack.c.h.b16 %v1077
    %v1380 = vunpack.c.l.b16 %v1078
    %v1381 = vunpack.c.h.b16 %v1078
    %v1382 = vunpack.c.l.b16 %v1079
    %v1383 = vunpack.c.h.b16 %v1079
    %v1384 = vunpack.c.l.b16 %v1080
    %v1385 = vunpack.c.h.b16 %v1080
    %v1386 = vunpack.c.l.b16 %v1081
    %v1387 = vunpack.c.h.b16 %v1081
    %v1388 = vunpack.c.l.b16 %v1082
    %v1389 = vunpack.c.h.b16 %v1082
    %v1390 = vunpack.c.l.b16 %v1083
    %v1391 = vunpack.c.h.b16 %v1083
    %v1392 = vunpack.c.l.b16 %v1084
    %v1393 = vunpack.c.h.b16 %v1084
    %v1394 = vunpack.c.l.b16 %v1085
    %v1395 = vunpack.c.h.b16 %v1085
    %v1396 = vunpack.c.l.b16 %v1086
    %v1397 = vunpack.c.h.b16 %v1086
    %v1398 = vunpack.c.l.b16 %v1087
    %v1399 = vunpack.c.h.b16 %v1087
    %v1400 = vunpack.c.l.b16 %v1088
    %v1401 = vunpack.c.h.b16 %v1088
    %v1402 = vunpack.c.l.b16 %v1089
    %v1403 = vunpack.c.h.b16 %v1089
    %v1404 = vunpack.c.l.b16 %v1090
    %v1405 = vunpack.c.h.b16 %v1090
    %v1406 = vunpack.c.l.b16 %v1091
    %v1407 = vunpack.c.h.b16 %v1091
    %v1408 = vunpack.c.l.b16 %v1092
    %v1409 = vunpack.c.h.b16 %v1092
    %v1410 = vunpack.c.l.b16 %v1093
    %v1411 = vunpack.c.h.b16 %v1093
    %v1412 = vunpack.c.l.b16 %v1094
    %v1413 = vunpack.c.h.b16 %v1094
    %v1414 = vunpack.c.l.b16 %v1095
    %v1415 = vunpack.c.h.b16 %v1095
    %v1416 = vunpack.c.l.b16 %v1096
    %v1417 = vunpack.c.h.b16 %v1096
    %v1418 = vunpack.c.l.b16 %v1097
    %v1419 = vunpack.c.h.b16 %v1097
    %v1420 = vunpack.c.l.b16 %v1098
    %v1421 = vunpack.c.h.b16 %v1098
    %v1422 = vunpack.c.l.b16 %v1099
    %v1423 = vunpack.c.h.b16 %v1099
    %v1424 = vunpack.c.l.b16 %v1100
    %v1425 = vunpack.c.h.b16 %v1100
    %v1426 = vunpack.c.l.b16 %v1101
    %v1427 = vunpack.c.h.b16 %v1101
    %v1428 = vunpack.c.l.b16 %v1102
    %v1429 = vunpack.c.h.b16 %v1102
    %v1430 = vunpack.c.l.b16 %v1103
    %v1431 = vunpack.c.h.b16 %v1103
    %v1432 = vunpack.c.l.b16 %v1104
    %v1433 = vunpack.c.h.b16 %v1104
    %v1434 = vunpack.c.l.b16 %v1105
    %v1435 = vunpack.c.h.b16 %v1105
    %v1436 = vunpack.c.l.b16 %v1106
    %v1437 = vunpack.c.h.b16 %v1106
    %v1438 = vunpack.c.l.b16 %v1107
    %v1439 = vunpack.c.h.b16 %v1107
    %v1440 = vunpack.c.l.b16 %v1108
    %v1441 = vunpack.c.h.b16 %v1108
    %v1442 = vunpack.c.l.b16 %v1109
    %v1443 = vunpack.c.h.b16 %v1109
    %v1444 = vunpack.c.l.b16 %v1110
    %v1445 = vunpack.c.h.b16 %v1110
    %v1446 = vunpack.c.l.b16 %v1111
    %v1447 = vunpack.c.h.b16 %v1111
    %v1448 = vunpack.c.l.b16 %v1112
    %v1449 = vunpack.c.h.b16 %v1112
    %v1450 = vunpack.c.l.b16 %v1113
    %v1451 = vunpack.c.h.b16 %v1113
    %v1452 = vunpack.c.l.b16 %v1114
    %v1453 = vunpack.c.h.b16 %v1114
    %v1454 = vunpack.c.l.b16 %v1115
    %v1455 = vunpack.c.h.b16 %v1115
    %v1456 = vunpack.c.l.b16 %v1116
    %v1457 = vunpack.c.h.b16 %v1116
    %v1458 = vunpack.c.l.b16 %v1117
    %v1459 = vunpack.c.h.b16 %v1117
    %v1460 = vunpack.c.l.b16 %v1118
    %v1461 = vunpack.c.h.b16 %v1118
    %v1462 = vunpack.c.l.b16 %v1119
    %v1463 = vunpack.c.h.b16 %v1119
    %v1464 = vunpack.c.l.b16 %v1120
    %v1465 = vunpack.c.h.b16 %v1120
    %v1466 = vunpack.c.l.b16 %v1121
    %v1467 = vunpack.c.h.b16 %v1121
    %v1468 = vunpack.c.l.b16 %v1122
    %v1469 = vunpack.c.h.b16 %v1122
    %v1470 = vunpack.c.l.b16 %v1123
    %v1471 = vunpack.c.h.b16 %v1123
    %v1472 = vunpack.c.l.b16 %v1124
    %v1473 = vunpack.c.h.b16 %v1124
    %v1474 = vunpack.c.l.b16 %v1125
    %v1475 = vunpack.c.h.b16 %v1125
    %v1476 = vunpack.c.l.b16 %v1126
    %v1477 = vunpack.c.h.b16 %v1126
    %v1478 = vunpack.c.l.b16 %v1127
    %v1479 = vunpack.c.h.b16 %v1127
    %v1480 = vunpack.c.l.b16 %v1128
    %v1481 = vunpack.c.h.b16 %v1128
    %v1482 = vunpack.c.l.b16 %v1129
    %v1483 = vunpack.c.h.b16 %v1129
    %v1484 = vunpack.c.l.b16 %v1130
    %v1485 = vunpack.c.h.b16 %v1130
    %v1486 = vunpack.c.l.b16 %v1131
    %v1487 = vunpack.c.h.b16 %v1131
    %v1488 = vunpack.c.l.b16 %v1132
    %v1489 = vunpack.c.h.b16 %v1132
    %v1490 = vunpack.c.l.b16 %v1133
    %v1491 = vunpack.c.h.b16 %v1133
    %v1492 = vunpack.c.l.b16 %v1134
    %v1493 = vunpack.c.h.b16 %v1134
    %v1494 = vunpack.c.l.b16 %v1135
    %v1495 = vunpack.c.h.b16 %v1135
    %v1496 = vunpack.c.l.b16 %v1136
    %v1497 = vunpack.c.h.b16 %v1136
    %v1498 = vunpack.c.l.b16 %v1137
    %v1499 = vunpack.c.h.b16 %v1137
    %v1500 = vunpack.c.l.b16 %v1138
    %v1501 = vunpack.c.h.b16 %v1138
    %v1502 = vunpack.c.l.b16 %v1139
    %v1503 = vunpack.c.h.b16 %v1139
    %v1504 = vunpack.c.l.b16 %v1140
    %v1505 = vunpack.c.h.b16 %v1140
    %v1506 = vunpack.c.l.b16 %v1141
    %v1507 = vunpack.c.h.b16 %v1141
    %v1508 = vunpack.c.l.b16 %v1142
    %v1509 = vunpack.c.h.b16 %v1142
    %v1510 = vunpack.c.l.b16 %v1143
    %v1511 = vunpack.c.h.b16 %v1143
    %v1512 = vunpack.c.l.b16 %v1144
    %v1513 = vunpack.c.h.b16 %v1144
    %v1514 = vunpack.c.l.b16 %v1145
    %v1515 = vunpack.c.h.b16 %v1145
    %v1516 = vunpack.c.l.b16 %v1146
    %v1517 = vunpack.c.h.b16 %v1146
    %v1518 = vunpack.c.l.b16 %v1147
    %v1519 = vunpack.c.h.b16 %v1147
    %v1520 = vunpack.c.l.b16 %v1148
    %v1521 = vunpack.c.h.b16 %v1148
    %v1522 = vunpack.c.l.b16 %v1149
    %v1523 = vunpack.c.h.b16 %v1149
    %v1524 = vunpack.c.l.b16 %v1150
    %v1525 = vunpack.c.h.b16 %v1150
    %v1526 = vunpack.c.l.b16 %v1151
    %v1527 = vunpack.c.h.b16 %v1151
    %v1528 = vunpack.c.l.b16 %v1152
    %v1529 = vunpack.c.h.b16 %v1152
    %v1530 = vunpack.c.l.b16 %v1153
    %v1531 = vunpack.c.h.b16 %v1153
    %v1532 = vunpack.c.l.b16 %v1154
    %v1533 = vunpack.c.h.b16 %v1154
    %v1534 = vunpack.c.l.b16 %v1155
    %v1535 = vunpack.c.h.b16 %v1155
    %v1536 = vunpack.c.l.b16 %v1156
    %v1537 = vunpack.c.h.b16 %v1156
    %v1538 = vunpack.c.l.b16 %v1157
    %v1539 = vunpack.c.h.b16 %v1157
    %v1540 = vunpack.c.l.b16 %v1158
    %v1541 = vunpack.c.h.b16 %v1158
    %v1542 = vunpack.c.l.b16 %v1159
    %v1543 = vunpack.c.h.b16 %v1159
    %v1544 = vunpack.c.l.b16 %v1160
    %v1545 = vunpack.c.h.b16 %v1160
    %v1546 = vunpack.c.l.b16 %v1161
    %v1547 = vunpack.c.h.b16 %v1161
    %v1548 = vunpack.c.l.b16 %v1162
    %v1549 = vunpack.c.h.b16 %v1162
    %v1550 = vunpack.c.l.b16 %v1163
    %v1551 = vunpack.c.h.b16 %v1163
    %v1552 = vunpack.c.l.b16 %v1164
    %v1553 = vunpack.c.h.b16 %v1164
    %v1554 = vunpack.c.l.b16 %v1165
    %v1555 = vunpack.c.h.b16 %v1165
    %v1556 = vunpack.c.l.b16 %v1166
    %v1557 = vunpack.c.h.b16 %v1166
    %v1558 = vunpack.c.l.b16 %v1167
    %v1559 = vunpack.c.h.b16 %v1167
    %v1560 = vunpack.c.l.b16 %v1168
    %v1561 = vunpack.c.h.b16 %v1168
    %v1562 = vunpack.c.l.b16 %v1169
    %v1563 = vunpack.c.h.b16 %v1169
    %v1564 = vunpack.c.l.b16 %v1170
    %v1565 = vunpack.c.h.b16 %v1170
    %v1566 = vunpack.c.l.b16 %v1171
    %v1567 = vunpack.c.h.b16 %v1171
    %v1568 = vunpack.c.l.b16 %v1172
    %v1569 = vunpack.c.h.b16 %v1172
    %v1570 = vunpack.c.l.b16 %v1173
    %v1571 = vunpack.c.h.b16 %v1173
    %v1572 = vunpack.c.l.b16 %v1174
    %v1573 = vunpack.c.h.b16 %v1174
    %v1574 = vunpack.c.l.b16 %v1175
    %v1575 = vunpack.c.h.b16 %v1175
    %v1576 = vunpack.c.l.b16 %v1176
    %v1577 = vunpack.c.h.b16 %v1176
    %v1578 = vunpack.c.l.b16 %v1177
    %v1579 = vunpack.c.h.b16 %v1177
    %v1580 = vunpack.c.l.b16 %v1178
    %v1581 = vunpack.c.h.b16 %v1178
    %v1582 = vunpack.c.l.b16 %v1179
    %v1583 = vunpack.c.h.b16 %v1179
    %v1584 = vunpack.c.l.b16 %v1180
    %v1585 = vunpack.c.h.b16 %v1180
    %v1586 = vunpack.c.l.b16 %v1181
    %v1587 = vunpack.c.h.b16 %v1181
    %v1588 = vpack.c.b16 %v1336, %v1332
    %v1589 = vpack.c.b16 %v1337, %v1333
    %v1590 = vpack.c.b16 %v1338, %v1334
    %v1591 = vpack.c.b16 %v1339, %v1335
    %v1592 = vpack.c.b16 %v1344, %v1340
    %v1593 = vpack.c.b16 %v1345, %v1341
    %v1594 = vpack.c.b16 %v1346, %v1342
    %v1595 = vpack.c.b16 %v1347, %v1343
    %v1596 = vpack.c.b16 %v1352, %v1348
    %v1597 = vpack.c.b16 %v1353, %v1349
    %v1598 = vpack.c.b16 %v1354, %v1350
    %v1599 = vpack.c.b16 %v1355, %v1351
    %v1600 = vpack.c.b16 %v1360, %v1356
    %v1601 = vpack.c.b16 %v1361, %v1357
    %v1602 = vpack.c.b16 %v1362, %v1358
    %v1603 = vpack.c.b16 %v1363, %v1359
    %v1604 = vpack.c.b16 %v1368, %v1364
    %v1605 = vpack.c.b16 %v1369, %v1365
    %v1606 = vpack.c.b16 %v1370, %v1366
    %v1607 = vpack.c.b16 %v1371, %v1367
    %v1608 = vpack.c.b16 %v1376, %v1372
    %v1609 = vpack.c.b16 %v1377, %v1373
    %v1610 = vpack.c.b16 %v1378, %v1374
    %v1611 = vpack.c.b16 %v1379, %v1375
    %v1612 = vpack.c.b16 %v1384, %v1380
    %v1613 = vpack.c.b16 %v1385, %v1381
    %v1614 = vpack.c.b16 %v1386, %v1382
    %v1615 = vpack.c.b16 %v1387, %v1383
    %v1616 = vpack.c.b16 %v1392, %v1388
    %v1617 = vpack.c.b16 %v1393, %v1389
    %v1618 = vpack.c.b16 %v1394, %v1390
    %v1619 = vpack.c.b16 %v1395, %v1391
    %v1620 = vpack.c.b16 %v1400, %v1396
    %v1621 = vpack.c.b16 %v1401, %v1397
    %v1622 = vpack.c.b16 %v1402, %v1398
    %v1623 = vpack.c.b16 %v1403, %v1399
    %v1624 = vpack.c.b16 %v1408, %v1404
    %v1625 = vpack.c.b16 %v1409, %v1405
    %v1626 = vpack.c.b16 %v1410, %v1406
    %v1627 = vpack.c.b16 %v1411, %v1407
    %v1628 = vpack.c.b16 %v1416, %v1412
    %v1629 = vpack.c.b16 %v1417, %v1413
    %v1630 = vpack.c.b16 %v1418, %v1414
    %v1631 = vpack.c.b16 %v1419, %v1415
    %v1632 = vpack.c.b16 %v1424, %v1420
    %v1633 = vpack.c.b16 %v1425, %v1421
    %v1634 = vpack.c.b16 %v1426, %v1422
    %v1635 = vpack.c.b16 %v1427, %v1423
    %v1636 = vpack.c.b16 %v1432, %v1428
    %v1637 = vpack.c.b16 %v1433, %v1429
    %v1638 = vpack.c.b16 %v1434, %v1430
    %v1639 = vpack.c.b16 %v1435, %v1431
    %v1640 = vpack.c.b16 %v1440, %v1436
    %v1641 = vpack.c.b16 %v1441, %v1437
    %v1642 = vpack.c.b16 %v1442, %v1438
    %v1643 = vpack.c.b16 %v1443, %v1439
    %v1644 = vpack.c.b16 %v1448, %v1444
    %v1645 = vpack.c.b16 %v1449, %v1445
    %v1646 = vpack.c.b16 %v1450, %v1446
    %v1647 = vpack.c.b16 %v1451, %v1447
    %v1648 = vpack.c.b16 %v1456, %v1452
    %v1649 = vpack.c.b16 %v1457, %v1453
    %v1650 = vpack.c.b16 %v1458, %v1454
    %v1651 = vpack.c.b16 %v1459, %v1455
    %v1652 = vpack.c.b16 %v1464, %v1460
    %v1653 = vpack.c.b16 %v1465, %v1461
    %v1654 = vpack.c.b16 %v1466, %v1462
    %v1655 = vpack.c.b16 %v1467, %v1463
    %v1656 = vpack.c.b16 %v1472, %v1468
    %v1657 = vpack.c.b16 %v1473, %v1469
    %v1658 = vpack.c.b16 %v1474, %v1470
    %v1659 = vpack.c.b16 %v1475, %v1471
    %v1660 = vpack.c.b16 %v1480, %v1476
    %v1661 = vpack.c.b16 %v1481, %v1477
    %v1662 = vpack.c.b16 %v1482, %v1478
    %v1663 = vpack.c.b16 %v1483, %v1479
    %v1664 = vpack.c.b16 %v1488, %v1484
    %v1665 = vpack.c.b16 %v1489, %v1485
    %v1666 = vpack.c.b16 %v1490, %v1486
    %v1667 = vpack.c.b16 %v1491, %v1487
    %v1668 = vpack.c.b16 %v1496, %v1492
    %v1669 = vpack.c.b16 %v1497, %v1493
    %v1670 = vpack.c.b16 %v1498, %v1494
    %v1671 = vpack.c.b16 %v1499, %v1495
    %v1672 = vpack.c.b16 %v1504, %v1500
    %v1673 = vpack.c.b16 %v1505, %v1501
    %v1674 = vpack.c.b16 %v1506, %v1502
    %v1675 = vpack.c.b16 %v1507, %v1503
    %v1676 = vpack.c.b16 %v1512, %v1508
    %v1677 = vpack.c.b16 %v1513, %v1509
    %v1678 = vpack.c.b16 %v1514, %v1510
    %v1679 = vpack.c.b16 %v1515, %v1511
    %v1680 = vpack.c.b16 %v1520, %v1516
    %v1681 = vpack.c.b16 %v1521, %v1517
    %v1682 = vpack.c.b16 %v1522, %v1518
    %v1683 = vpack.c.b16 %v1523, %v1519
    %v1684 = vpack.c.b16 %v1528, %v1524
    %v1685 = vpack.c.b16 %v1529, %v1525
    %v1686 = vpack.c.b16 %v1530, %v1526
    %v1687 = vpack.c.b16 %v1531, %v1527
    %v1688 = vpack.c.b16 %v1536, %v1532
    %v1689 = vpack.c.b16 %v1537, %v1533
    %v1690 = vpack.c.b16 %v1538, %v1534
    %v1691 = vpack.c.b16 %v1539, %v1535
    %v1692 = vpack.c.b16 %v1544, %v1540
    %v1693 = vpack.c.b16 %v1545, %v1541
    %v1694 = vpack.c.b16 %v1546, %v1542
    %v1695 = vpack.c.b16 %v1547, %v1543
    %v1696 = vpack.c.b16 %v1552, %v1548
    %v1697 = vpack.c.b16 %v1553, %v1549
    %v1698 = vpack.c.b16 %v1554, %v1550
    %v1699 = vpack.c.b16 %v1555, %v1551
    %v1700 = vpack.c.b16 %v1560, %v1556
    %v1701 = vpack.c.b16 %v1561, %v1557
    %v1702 = vpack.c.b16 %v1562, %v1558
    %v1703 = vpack.c.b16 %v1563, %v1559
    %v1704 = vpack.c.b16 %v1568, %v1564
    %v1705 = vpack.c.b16 %v1569, %v1565
    %v1706 = vpack.c.b16 %v1570, %v1566
    %v1707 = vpack.c.b16 %v1571, %v1567
    %v1708 = vpack.c.b16 %v1576, %v1572
    %v1709 = vpack.c.b16 %v1577, %v1573
    %v1710 = vpack.c.b16 %v1578, %v1574
    %v1711 = vpack.c.b16 %v1579, %v1575
    %v1712 = vpack.c.b16 %v1584, %v1580
    %v1713 = vpack.c.b16 %v1585, %v1581
    %v1714 = vpack.c.b16 %v1586, %v1582
    %v1715 = vpack.c.b16 %v1587, %v1583
    %1844 = vmatprep.subr.bf16.mxu0 %v1589
    %1845 = vmatpush1.bf16.msra.mxu0 %v1588
    %1846 = vmatprep.subr.bf16.mxu0 %v1593
    %1847 = vmatpush1.bf16.msra.mxu0 %v1592
    %1848 = vmatprep.subr.bf16.mxu0 %v1597
    %1849 = vmatpush1.bf16.msra.mxu0 %v1596
    %1850 = vmatprep.subr.bf16.mxu0 %v1601
    %1851 = vmatpush1.bf16.msra.mxu0 %v1600
    %1852 = vmatprep.subr.bf16.mxu0 %v1605
    %1853 = vmatpush1.bf16.msra.mxu0 %v1604
    %1854 = vmatprep.subr.bf16.mxu0 %v1609
    %1855 = vmatpush1.bf16.msra.mxu0 %v1608
    %1856 = vmatprep.subr.bf16.mxu0 %v1613
    %1857 = vmatpush1.bf16.msra.mxu0 %v1612
    %1858 = vmatprep.subr.bf16.mxu0 %v1617
    %1859 = vmatpush1.bf16.msra.mxu0 %v1616
    %1860 = vmatprep.subr.bf16.mxu0 %v1621
    %1861 = vmatpush1.bf16.msra.mxu0 %v1620
    %1862 = vmatprep.subr.bf16.mxu0 %v1625
    %1863 = vmatpush1.bf16.msra.mxu0 %v1624
    %1864 = vmatprep.subr.bf16.mxu0 %v1629
    %1865 = vmatpush1.bf16.msra.mxu0 %v1628
    %1866 = vmatprep.subr.bf16.mxu0 %v1633
    %1867 = vmatpush1.bf16.msra.mxu0 %v1632
    %1868 = vmatprep.subr.bf16.mxu0 %v1637
    %1869 = vmatpush1.bf16.msra.mxu0 %v1636
    %1870 = vmatprep.subr.bf16.mxu0 %v1641
    %1871 = vmatpush1.bf16.msra.mxu0 %v1640
    %1872 = vmatprep.subr.bf16.mxu0 %v1645
    %1873 = vmatpush1.bf16.msra.mxu0 %v1644
    %1874 = vmatprep.subr.bf16.mxu0 %v1649
    %1875 = vmatpush1.bf16.msra.mxu0 %v1648
    %1876 = vmatprep.mubr.bf16.mxu0 %v1051
    %1877 = vmatmul.mubr.bf16.gmra.mrb[0].mxu0 %v1050
    %v1878 = vpop.f32.mrb[0].mxu0
    %v1879 = vadd.f32 %v1187, %v1878
    %v1880 = vpop.f32.mrb[0].mxu0
    %v1881 = vadd.f32 %v1191, %v1880
    %v1882 = vpop.f32.mrb[0].mxu0
    %v1883 = vadd.f32 %v1187, %v1882
    %v1884 = vpop.f32.mrb[0].mxu0
    %v1885 = vadd.f32 %v1191, %v1884
    %1886 = vdwg.mxu0
    %1887 = vmatprep.subr.bf16.mxu0 %v1653
    %1888 = vmatpush1.bf16.msra.mxu0 %v1652
    %1889 = vmatprep.subr.bf16.mxu0 %v1657
    %1890 = vmatpush1.bf16.msra.mxu0 %v1656
    %1891 = vmatprep.subr.bf16.mxu0 %v1661
    %1892 = vmatpush1.bf16.msra.mxu0 %v1660
    %1893 = vmatprep.subr.bf16.mxu0 %v1665
    %1894 = vmatpush1.bf16.msra.mxu0 %v1664
    %1895 = vmatprep.subr.bf16.mxu0 %v1669
    %1896 = vmatpush1.bf16.msra.mxu0 %v1668
    %1897 = vmatprep.subr.bf16.mxu0 %v1673
    %1898 = vmatpush1.bf16.msra.mxu0 %v1672
    %1899 = vmatprep.subr.bf16.mxu0 %v1677
    %1900 = vmatpush1.bf16.msra.mxu0 %v1676
    %1901 = vmatprep.subr.bf16.mxu0 %v1681
    %1902 = vmatpush1.bf16.msra.mxu0 %v1680
    %1903 = vmatprep.subr.bf16.mxu0 %v1685
    %1904 = vmatpush1.bf16.msra.mxu0 %v1684
    %1905 = vmatprep.subr.bf16.mxu0 %v1689
    %1906 = vmatpush1.bf16.msra.mxu0 %v1688
    %1907 = vmatprep.subr.bf16.mxu0 %v1693
    %1908 = vmatpush1.bf16.msra.mxu0 %v1692
    %1909 = vmatprep.subr.bf16.mxu0 %v1697
    %1910 = vmatpush1.bf16.msra.mxu0 %v1696
    %1911 = vmatprep.subr.bf16.mxu0 %v1701
    %1912 = vmatpush1.bf16.msra.mxu0 %v1700
    %1913 = vmatprep.subr.bf16.mxu0 %v1705
    %1914 = vmatpush1.bf16.msra.mxu0 %v1704
    %1915 = vmatprep.subr.bf16.mxu0 %v1709
    %1916 = vmatpush1.bf16.msra.mxu0 %v1708
    %1917 = vmatprep.subr.bf16.mxu0 %v1713
    %1918 = vmatpush1.bf16.msra.mxu0 %v1712
    %1919 = vmatprep.mubr.bf16.mxu0 %v1053
    %1920 = vmatmul.mubr.bf16.gmra.mrb[0].mxu0 %v1052
    %v1921 = vpop.f32.mrb[0].mxu0
    %v1922 = vadd.f32 %v1879, %v1921
    %v1923 = vpop.f32.mrb[0].mxu0
    %v1924 = vadd.f32 %v1881, %v1923
    %v1925 = vpop.f32.mrb[0].mxu0
    %v1926 = vadd.f32 %v1883, %v1925
    %v1927 = vpop.f32.mrb[0].mxu0
    %v1928 = vadd.f32 %v1885, %v1927
    %1929 = vdwg.mxu0
    %1930 = vmatprep.subr.bf16.mxu0 %v1591
    %1931 = vmatpush1.bf16.msra.mxu0 %v1590
    %1932 = vmatprep.subr.bf16.mxu0 %v1595
    %1933 = vmatpush1.bf16.msra.mxu0 %v1594
    %1934 = vmatprep.subr.bf16.mxu0 %v1599
    %1935 = vmatpush1.bf16.msra.mxu0 %v1598
    %1936 = vmatprep.subr.bf16.mxu0 %v1603
    %1937 = vmatpush1.bf16.msra.mxu0 %v1602
    %1938 = vmatprep.subr.bf16.mxu0 %v1607
    %1939 = vmatpush1.bf16.msra.mxu0 %v1606
    %1940 = vmatprep.subr.bf16.mxu0 %v1611
    %1941 = vmatpush1.bf16.msra.mxu0 %v1610
    %1942 = vmatprep.subr.bf16.mxu0 %v1615
    %1943 = vmatpush1.bf16.msra.mxu0 %v1614
    %1944 = vmatprep.subr.bf16.mxu0 %v1619
    %1945 = vmatpush1.bf16.msra.mxu0 %v1618
    %1946 = vmatprep.subr.bf16.mxu0 %v1623
    %1947 = vmatpush1.bf16.msra.mxu0 %v1622
    %1948 = vmatprep.subr.bf16.mxu0 %v1627
    %1949 = vmatpush1.bf16.msra.mxu0 %v1626
    %1950 = vmatprep.subr.bf16.mxu0 %v1631
    %1951 = vmatpush1.bf16.msra.mxu0 %v1630
    %1952 = vmatprep.subr.bf16.mxu0 %v1635
    %1953 = vmatpush1.bf16.msra.mxu0 %v1634
    %1954 = vmatprep.subr.bf16.mxu0 %v1639
    %1955 = vmatpush1.bf16.msra.mxu0 %v1638
    %1956 = vmatprep.subr.bf16.mxu0 %v1643
    %1957 = vmatpush1.bf16.msra.mxu0 %v1642
    %1958 = vmatprep.subr.bf16.mxu0 %v1647
    %1959 = vmatpush1.bf16.msra.mxu0 %v1646
    %1960 = vmatprep.subr.bf16.mxu0 %v1651
    %1961 = vmatpush1.bf16.msra.mxu0 %v1650
    %1962 = vmatprep.mubr.bf16.mxu0 %v1051
    %1963 = vmatmul.mubr.bf16.gmra.mrb[0].mxu0 %v1050
    %v1964 = vpop.f32.mrb[0].mxu0
    %v1965 = vadd.f32 %v1195, %v1964
    %v1966 = vpop.f32.mrb[0].mxu0
    %v1967 = vadd.f32 %v1199, %v1966
    %v1968 = vpop.f32.mrb[0].mxu0
    %v1969 = vadd.f32 %v1195, %v1968
    %v1970 = vpop.f32.mrb[0].mxu0
    %v1971 = vadd.f32 %v1199, %v1970
    %1972 = vdwg.mxu0
    %1973 = vmatprep.subr.bf16.mxu0 %v1655
    %1974 = vmatpush1.bf16.msra.mxu0 %v1654
    %1975 = vmatprep.subr.bf16.mxu0 %v1659
    %1976 = vmatpush1.bf16.msra.mxu0 %v1658
    %1977 = vmatprep.subr.bf16.mxu0 %v1663
    %1978 = vmatpush1.bf16.msra.mxu0 %v1662
    %1979 = vmatprep.subr.bf16.mxu0 %v1667
    %1980 = vmatpush1.bf16.msra.mxu0 %v1666
    %1981 = vmatprep.subr.bf16.mxu0 %v1671
    %1982 = vmatpush1.bf16.msra.mxu0 %v1670
    %1983 = vmatprep.subr.bf16.mxu0 %v1675
    %1984 = vmatpush1.bf16.msra.mxu0 %v1674
    %1985 = vmatprep.subr.bf16.mxu0 %v1679
    %1986 = vmatpush1.bf16.msra.mxu0 %v1678
    %1987 = vmatprep.subr.bf16.mxu0 %v1683
    %1988 = vmatpush1.bf16.msra.mxu0 %v1682
    %1989 = vmatprep.subr.bf16.mxu0 %v1687
    %1990 = vmatpush1.bf16.msra.mxu0 %v1686
    %1991 = vmatprep.subr.bf16.mxu0 %v1691
    %1992 = vmatpush1.bf16.msra.mxu0 %v1690
    %1993 = vmatprep.subr.bf16.mxu0 %v1695
    %1994 = vmatpush1.bf16.msra.mxu0 %v1694
    %1995 = vmatprep.subr.bf16.mxu0 %v1699
    %1996 = vmatpush1.bf16.msra.mxu0 %v1698
    %1997 = vmatprep.subr.bf16.mxu0 %v1703
    %1998 = vmatpush1.bf16.msra.mxu0 %v1702
    %1999 = vmatprep.subr.bf16.mxu0 %v1707
    %2000 = vmatpush1.bf16.msra.mxu0 %v1706
    %2001 = vmatprep.subr.bf16.mxu0 %v1711
    %2002 = vmatpush1.bf16.msra.mxu0 %v1710
    %2003 = vmatprep.subr.bf16.mxu0 %v1715
    %2004 = vmatpush1.bf16.msra.mxu0 %v1714
    %2005 = vmatprep.mubr.bf16.mxu0 %v1053
    %2006 = vmatmul.mubr.bf16.gmra.mrb[0].mxu0 %v1052
    %v2007 = vpop.f32.mrb[0].mxu0
    %v2008 = vadd.f32 %v1965, %v2007
    %v2009 = vpop.f32.mrb[0].mxu0
    %v2010 = vadd.f32 %v1967, %v2009
    %v2011 = vpop.f32.mrb[0].mxu0
    %v2012 = vadd.f32 %v1969, %v2011
    %v2013 = vpop.f32.mrb[0].mxu0
    %v2014 = vadd.f32 %v1971, %v2013
    %2015 = vdwg.mxu0
    %v2016 = vmax.f32 %v1922, 0.0
    %v2017 = vmax.f32 %v1924, 0.0
    %v2018 = vmax.f32 %v2008, 0.0
    %v2019 = vmax.f32 %v2010, 0.0
    %v2020 = vmax.f32 %v1926, 0.0
    %v2021 = vmax.f32 %v1928, 0.0
    %v2022 = vmax.f32 %v2012, 0.0
    %v2023 = vmax.f32 %v2014, 0.0
    %v2024 = vpack.c.bf16 %v2020, %v2016
    %v2025 = vpack.c.bf16 %v2021, %v2017
    %v2026 = vpack.c.bf16 %v2022, %v2018
    %v2027 = vpack.c.bf16 %v2023, %v2019
    %v2028 = vld [vmem:[#allocation6] sm:$0xf]
    %v2029 = vld [vmem:[#allocation6 + $0x4] sm:$0xf]
    %v2030 = vld [vmem:[#allocation6 + $0x8] sm:$0xf]
    %v2031 = vld [vmem:[#allocation6 + $0xc] sm:$0xf]
    %v2032 = vld [vmem:[#allocation6 + $0x10] sm:$0xf]
    %v2033 = vld [vmem:[#allocation6 + $0x14] sm:$0xf]
    %v2034 = vld [vmem:[#allocation6 + $0x18] sm:$0xf]
    %v2035 = vld [vmem:[#allocation6 + $0x1c] sm:$0xf]
    %v2036 = vld [vmem:[#allocation6 + $0x20] sm:$0xf]
    %v2037 = vld [vmem:[#allocation6 + $0x24] sm:$0xf]
    %v2038 = vld [vmem:[#allocation6 + $0x28] sm:$0xf]
    %v2039 = vld [vmem:[#allocation6 + $0x2c] sm:$0xf]
    %v2040 = vld [vmem:[#allocation6 + $0x30] sm:$0xf]
    %v2041 = vld [vmem:[#allocation6 + $0x34] sm:$0xf]
    %v2042 = vld [vmem:[#allocation6 + $0x38] sm:$0xf]
    %v2043 = vld [vmem:[#allocation6 + $0x3c] sm:$0xf]
    %v2044 = vld [vmem:[#allocation6 + $0x40] sm:$0xf]
    %v2045 = vld [vmem:[#allocation6 + $0x44] sm:$0xf]
    %v2046 = vld [vmem:[#allocation6 + $0x48] sm:$0xf]
    %v2047 = vld [vmem:[#allocation6 + $0x4c] sm:$0xf]
    %v2048 = vld [vmem:[#allocation6 + $0x50] sm:$0xf]
    %v2049 = vld [vmem:[#allocation6 + $0x54] sm:$0xf]
    %v2050 = vld [vmem:[#allocation6 + $0x58] sm:$0xf]
    %v2051 = vld [vmem:[#allocation6 + $0x5c] sm:$0xf]
    %v2052 = vld [vmem:[#allocation6 + $0x60] sm:$0xf]
    %v2053 = vld [vmem:[#allocation6 + $0x64] sm:$0xf]
    %v2054 = vld [vmem:[#allocation6 + $0x68] sm:$0xf]
    %v2055 = vld [vmem:[#allocation6 + $0x6c] sm:$0xf]
    %v2056 = vld [vmem:[#allocation6 + $0x70] sm:$0xf]
    %v2057 = vld [vmem:[#allocation6 + $0x74] sm:$0xf]
    %v2058 = vld [vmem:[#allocation6 + $0x78] sm:$0xf]
    %v2059 = vld [vmem:[#allocation6 + $0x7c] sm:$0xf]
    %v2060 = vld [vmem:[#allocation6 + $0x80] sm:$0xf]
    %v2061 = vld [vmem:[#allocation6 + $0x84] sm:$0xf]
    %v2062 = vld [vmem:[#allocation6 + $0x88] sm:$0xf]
    %v2063 = vld [vmem:[#allocation6 + $0x8c] sm:$0xf]
    %v2064 = vld [vmem:[#allocation6 + $0x90] sm:$0xf]
    %v2065 = vld [vmem:[#allocation6 + $0x94] sm:$0xf]
    %v2066 = vld [vmem:[#allocation6 + $0x98] sm:$0xf]
    %v2067 = vld [vmem:[#allocation6 + $0x9c] sm:$0xf]
    %v2068 = vld [vmem:[#allocation6 + $0xa0] sm:$0xf]
    %v2069 = vld [vmem:[#allocation6 + $0xa4] sm:$0xf]
    %v2070 = vld [vmem:[#allocation6 + $0xa8] sm:$0xf]
    %v2071 = vld [vmem:[#allocation6 + $0xac] sm:$0xf]
    %v2072 = vld [vmem:[#allocation6 + $0xb0] sm:$0xf]
    %v2073 = vld [vmem:[#allocation6 + $0xb4] sm:$0xf]
    %v2074 = vld [vmem:[#allocation6 + $0xb8] sm:$0xf]
    %v2075 = vld [vmem:[#allocation6 + $0xbc] sm:$0xf]
    %v2076 = vld [vmem:[#allocation6 + $0xc0] sm:$0xf]
    %v2077 = vld [vmem:[#allocation6 + $0xc4] sm:$0xf]
    %v2078 = vld [vmem:[#allocation6 + $0xc8] sm:$0xf]
    %v2079 = vld [vmem:[#allocation6 + $0xcc] sm:$0xf]
    %v2080 = vld [vmem:[#allocation6 + $0xd0] sm:$0xf]
    %v2081 = vld [vmem:[#allocation6 + $0xd4] sm:$0xf]
    %v2082 = vld [vmem:[#allocation6 + $0xd8] sm:$0xf]
    %v2083 = vld [vmem:[#allocation6 + $0xdc] sm:$0xf]
    %v2084 = vld [vmem:[#allocation6 + $0xe0] sm:$0xf]
    %v2085 = vld [vmem:[#allocation6 + $0xe4] sm:$0xf]
    %v2086 = vld [vmem:[#allocation6 + $0xe8] sm:$0xf]
    %v2087 = vld [vmem:[#allocation6 + $0xec] sm:$0xf]
    %v2088 = vld [vmem:[#allocation6 + $0xf0] sm:$0xf]
    %v2089 = vld [vmem:[#allocation6 + $0xf4] sm:$0xf]
    %v2090 = vld [vmem:[#allocation6 + $0xf8] sm:$0xf]
    %v2091 = vld [vmem:[#allocation6 + $0xfc] sm:$0xf]
    %v2092 = vld [vmem:[%s6] sm:$0x1]
    %v2094 = vlaneseq
    %v2095 = vshrl.u32 %v2094, 7
    %v2096 = vsub.s32 0, %v2095
    %v2097 = vrot.slane %v2092, %v2096
    %v2163 = vunpack.c.l.b16 %v2028
    %v2164 = vunpack.c.l.b16 %v2029
    %v2165 = vunpack.c.l.b16 %v2030
    %v2166 = vunpack.c.l.b16 %v2031
    %v2167 = vunpack.c.l.b16 %v2032
    %v2168 = vunpack.c.l.b16 %v2033
    %v2169 = vunpack.c.l.b16 %v2034
    %v2170 = vunpack.c.l.b16 %v2035
    %v2171 = vunpack.c.l.b16 %v2036
    %v2172 = vunpack.c.l.b16 %v2037
    %v2173 = vunpack.c.l.b16 %v2038
    %v2174 = vunpack.c.l.b16 %v2039
    %v2175 = vunpack.c.l.b16 %v2040
    %v2176 = vunpack.c.l.b16 %v2041
    %v2177 = vunpack.c.l.b16 %v2042
    %v2178 = vunpack.c.l.b16 %v2043
    %v2179 = vunpack.c.l.b16 %v2044
    %v2180 = vunpack.c.l.b16 %v2045
    %v2181 = vunpack.c.l.b16 %v2046
    %v2182 = vunpack.c.l.b16 %v2047
    %v2183 = vunpack.c.l.b16 %v2048
    %v2184 = vunpack.c.l.b16 %v2049
    %v2185 = vunpack.c.l.b16 %v2050
    %v2186 = vunpack.c.l.b16 %v2051
    %v2187 = vunpack.c.l.b16 %v2052
    %v2188 = vunpack.c.l.b16 %v2053
    %v2189 = vunpack.c.l.b16 %v2054
    %v2190 = vunpack.c.l.b16 %v2055
    %v2191 = vunpack.c.l.b16 %v2056
    %v2192 = vunpack.c.l.b16 %v2057
    %v2193 = vunpack.c.l.b16 %v2058
    %v2194 = vunpack.c.l.b16 %v2059
    %v2195 = vunpack.c.l.b16 %v2060
    %v2196 = vunpack.c.l.b16 %v2061
    %v2197 = vunpack.c.l.b16 %v2062
    %v2198 = vunpack.c.l.b16 %v2063
    %v2199 = vunpack.c.l.b16 %v2064
    %v2200 = vunpack.c.l.b16 %v2065
    %v2201 = vunpack.c.l.b16 %v2066
    %v2202 = vunpack.c.l.b16 %v2067
    %v2203 = vunpack.c.l.b16 %v2068
    %v2204 = vunpack.c.l.b16 %v2069
    %v2205 = vunpack.c.l.b16 %v2070
    %v2206 = vunpack.c.l.b16 %v2071
    %v2207 = vunpack.c.l.b16 %v2072
    %v2208 = vunpack.c.l.b16 %v2073
    %v2209 = vunpack.c.l.b16 %v2074
    %v2210 = vunpack.c.l.b16 %v2075
    %v2211 = vunpack.c.l.b16 %v2076
    %v2212 = vunpack.c.l.b16 %v2077
    %v2213 = vunpack.c.l.b16 %v2078
    %v2214 = vunpack.c.l.b16 %v2079
    %v2215 = vunpack.c.l.b16 %v2080
    %v2216 = vunpack.c.l.b16 %v2081
    %v2217 = vunpack.c.l.b16 %v2082
    %v2218 = vunpack.c.l.b16 %v2083
    %v2219 = vunpack.c.l.b16 %v2084
    %v2220 = vunpack.c.l.b16 %v2085
    %v2221 = vunpack.c.l.b16 %v2086
    %v2222 = vunpack.c.l.b16 %v2087
    %v2223 = vunpack.c.l.b16 %v2088
    %v2224 = vunpack.c.l.b16 %v2089
    %v2225 = vunpack.c.l.b16 %v2090
    %v2226 = vunpack.c.l.b16 %v2091
    %v2227 = vpack.c.b16 %v2164, %v2163
    %v2228 = vpack.c.b16 %v2166, %v2165
    %v2229 = vpack.c.b16 %v2168, %v2167
    %v2230 = vpack.c.b16 %v2170, %v2169
    %v2231 = vpack.c.b16 %v2172, %v2171
    %v2232 = vpack.c.b16 %v2174, %v2173
    %v2233 = vpack.c.b16 %v2176, %v2175
    %v2234 = vpack.c.b16 %v2178, %v2177
    %v2235 = vpack.c.b16 %v2180, %v2179
    %v2236 = vpack.c.b16 %v2182, %v2181
    %v2237 = vpack.c.b16 %v2184, %v2183
    %v2238 = vpack.c.b16 %v2186, %v2185
    %v2239 = vpack.c.b16 %v2188, %v2187
    %v2240 = vpack.c.b16 %v2190, %v2189
    %v2241 = vpack.c.b16 %v2192, %v2191
    %v2242 = vpack.c.b16 %v2194, %v2193
    %v2243 = vpack.c.b16 %v2196, %v2195
    %v2244 = vpack.c.b16 %v2198, %v2197
    %v2245 = vpack.c.b16 %v2200, %v2199
    %v2246 = vpack.c.b16 %v2202, %v2201
    %v2247 = vpack.c.b16 %v2204, %v2203
    %v2248 = vpack.c.b16 %v2206, %v2205
    %v2249 = vpack.c.b16 %v2208, %v2207
    %v2250 = vpack.c.b16 %v2210, %v2209
    %v2251 = vpack.c.b16 %v2212, %v2211
    %v2252 = vpack.c.b16 %v2214, %v2213
    %v2253 = vpack.c.b16 %v2216, %v2215
    %v2254 = vpack.c.b16 %v2218, %v2217
    %v2255 = vpack.c.b16 %v2220, %v2219
    %v2256 = vpack.c.b16 %v2222, %v2221
    %v2257 = vpack.c.b16 %v2224, %v2223
    %v2258 = vpack.c.b16 %v2226, %v2225
    %2291 = vmatprep.subr.bf16.mxu0 0
    %2292 = vmatpush1.bf16.msra.mxu0 %v2227
    %2293 = vmatprep.subr.bf16.mxu0 0
    %2294 = vmatpush1.bf16.msra.mxu0 %v2228
    %2295 = vmatprep.subr.bf16.mxu0 0
    %2296 = vmatpush1.bf16.msra.mxu0 %v2229
    %2297 = vmatprep.subr.bf16.mxu0 0
    %2298 = vmatpush1.bf16.msra.mxu0 %v2230
    %2299 = vmatprep.subr.bf16.mxu0 0
    %2300 = vmatpush1.bf16.msra.mxu0 %v2231
    %2301 = vmatprep.subr.bf16.mxu0 0
    %2302 = vmatpush1.bf16.msra.mxu0 %v2232
    %2303 = vmatprep.subr.bf16.mxu0 0
    %2304 = vmatpush1.bf16.msra.mxu0 %v2233
    %2305 = vmatprep.subr.bf16.mxu0 0
    %2306 = vmatpush1.bf16.msra.mxu0 %v2234
    %2307 = vmatprep.subr.bf16.mxu0 0
    %2308 = vmatpush1.bf16.msra.mxu0 %v2235
    %2309 = vmatprep.subr.bf16.mxu0 0
    %2310 = vmatpush1.bf16.msra.mxu0 %v2236
    %2311 = vmatprep.subr.bf16.mxu0 0
    %2312 = vmatpush1.bf16.msra.mxu0 %v2237
    %2313 = vmatprep.subr.bf16.mxu0 0
    %2314 = vmatpush1.bf16.msra.mxu0 %v2238
    %2315 = vmatprep.subr.bf16.mxu0 0
    %2316 = vmatpush1.bf16.msra.mxu0 %v2239
    %2317 = vmatprep.subr.bf16.mxu0 0
    %2318 = vmatpush1.bf16.msra.mxu0 %v2240
    %2319 = vmatprep.subr.bf16.mxu0 0
    %2320 = vmatpush1.bf16.msra.mxu0 %v2241
    %2321 = vmatprep.subr.bf16.mxu0 0
    %2322 = vmatpush1.bf16.msra.mxu0 %v2242
    %2323 = vmatprep.mubr.bf16.mxu0 %v2025
    %2324 = vmatmul.mubr.bf16.gmra.mrb[0].mxu0 %v2024
    %v2325 = vpop.f32.mrb[0].mxu0
    %v2326 = vadd.f32 %v2097, %v2325
    %v2327 = vpop.f32.mrb[0].mxu0
    %v2328 = vpop.f32.mrb[0].mxu0
    %v2329 = vadd.f32 %v2097, %v2328
    %v2330 = vpop.f32.mrb[0].mxu0
    %2331 = vdwg.mxu0
    %2332 = vmatprep.subr.bf16.mxu0 0
    %2333 = vmatpush1.bf16.msra.mxu0 %v2243
    %2334 = vmatprep.subr.bf16.mxu0 0
    %2335 = vmatpush1.bf16.msra.mxu0 %v2244
    %2336 = vmatprep.subr.bf16.mxu0 0
    %2337 = vmatpush1.bf16.msra.mxu0 %v2245
    %2338 = vmatprep.subr.bf16.mxu0 0
    %2339 = vmatpush1.bf16.msra.mxu0 %v2246
    %2340 = vmatprep.subr.bf16.mxu0 0
    %2341 = vmatpush1.bf16.msra.mxu0 %v2247
    %2342 = vmatprep.subr.bf16.mxu0 0
    %2343 = vmatpush1.bf16.msra.mxu0 %v2248
    %2344 = vmatprep.subr.bf16.mxu0 0
    %2345 = vmatpush1.bf16.msra.mxu0 %v2249
    %2346 = vmatprep.subr.bf16.mxu0 0
    %2347 = vmatpush1.bf16.msra.mxu0 %v2250
    %2348 = vmatprep.subr.bf16.mxu0 0
    %2349 = vmatpush1.bf16.msra.mxu0 %v2251
    %2350 = vmatprep.subr.bf16.mxu0 0
    %2351 = vmatpush1.bf16.msra.mxu0 %v2252
    %2352 = vmatprep.subr.bf16.mxu0 0
    %2353 = vmatpush1.bf16.msra.mxu0 %v2253
    %2354 = vmatprep.subr.bf16.mxu0 0
    %2355 = vmatpush1.bf16.msra.mxu0 %v2254
    %2356 = vmatprep.subr.bf16.mxu0 0
    %2357 = vmatpush1.bf16.msra.mxu0 %v2255
    %2358 = vmatprep.subr.bf16.mxu0 0
    %2359 = vmatpush1.bf16.msra.mxu0 %v2256
    %2360 = vmatprep.subr.bf16.mxu0 0
    %2361 = vmatpush1.bf16.msra.mxu0 %v2257
    %2362 = vmatprep.subr.bf16.mxu0 0
    %2363 = vmatpush1.bf16.msra.mxu0 %v2258
    %2364 = vmatprep.mubr.bf16.mxu0 %v2027
    %2365 = vmatmul.mubr.bf16.gmra.mrb[0].mxu0 %v2026
    %v2366 = vpop.f32.mrb[0].mxu0
    %v2367 = vadd.f32 %v2326, %v2366
    %v2368 = vpop.f32.mrb[0].mxu0
    %v2369 = vpop.f32.mrb[0].mxu0
    %v2370 = vadd.f32 %v2329, %v2369
    %v2371 = vpop.f32.mrb[0].mxu0
    %2372 = vdwg.mxu0
    %2373 = vst [vmem:[%s7] sm:$0xff] %v2367
    %2374 = vst [vmem:[%s7 + $0x8] sm:$0xff] %v2370
    // Predicated region
    $region42: #{discriminator_forward.1} parent=1 // pred_check
      _
    $region43: #{discriminator_forward.1} parent=1 // pred_check_branch
      %2376 = sbr.rel (0) target = $region45
    $region44: #{discriminator_forward.1} parent=1 // pred_region
      _
    $region45: #{discriminator_forward.1} parent=1 // pred_fallthru
      _
    // Predicated region
    $region46: #{discriminator_forward.1} parent=1 // pred_check
      _
    $region47: #{discriminator_forward.1} parent=1 // pred_check_branch
      %2378 = sbr.rel (0) target = $region49
    $region48: #{discriminator_forward.1} parent=1 // pred_region
      _
    $region49: #{discriminator_forward.1} parent=1 // pred_fallthru
      _
    %2379 = vsyncpa [#allocation3], 1
    %2380 = vsyncpa [#allocation5], 1

</llo_original>
